<compile_context>
chip_gen: v6e
topology: v6e:2x2x1
jax: 0.10.0
libtpu: 0.0.40
codegen_flags: <defaults>
</compile_context>

<pallas_src>
import jax
import jax.numpy as jnp
from jax.experimental import pallas as pl
from jax.experimental.pallas import tpu as pltpu


def _leaky_relu(x, slope=0.01):
    # max(x, slope*x) == LeakyReLU(slope) for slope in (0, 1).
    return jnp.maximum(x, slope * x)


def generator_kernel(x_ref, w1_ref, b1_ref, w2_ref, b2_ref, w3_ref, b3_ref, o_ref):
    # Layer 1: Linear(z_dim -> 128). bf16 operands, f32 MXU accumulation,
    # then a bf16 bias-add + LeakyReLU epilogue (layer 2 truncates to bf16
    # anyway, so no extra accuracy loss).
    h1 = jnp.dot(x_ref[...].astype(jnp.bfloat16), w1_ref[...],
                 preferred_element_type=jnp.float32)
    h1 = _leaky_relu(h1.astype(jnp.bfloat16) + b1_ref[...])

    # Layer 2: Linear(128 -> 512) + LeakyReLU, same bf16 epilogue.
    h2 = jnp.dot(h1, w2_ref[...], preferred_element_type=jnp.float32)
    h2 = _leaky_relu(h2.astype(jnp.bfloat16) + b2_ref[...])

    # Layer 3: Linear(512 -> im_dim*im_dim) + Tanh. Final epilogue in f32.
    h3 = jnp.dot(h2, w3_ref[...], preferred_element_type=jnp.float32)
    o_ref[...] = jnp.tanh(h3 + b3_ref[...])


def _pick_block_b(B):
    """Batch-tile heuristic.

    Prefer a tile that divides B (no runtime pad/slice), gives >= 2 grid
    tiles (keeps both v7x TensorCores busy and lets the BlockSpec pipeline
    overlap), and is >= 256 rows when B allows it (fills the 256x256 MXU in
    M on v6e/v7x). For tiny batches fall back to a single whole-batch tile,
    which is also the best choice on single-TC v5e/v6e.
    """
    for cand in (512, 384, 256, 128, 64, 32, 16, 8):
        if B >= 2 * cand and B % cand == 0:
            return cand
    return min(B, 512)


def generator_forward(x, params, *, block_b=None):
    """x: [B, z_dim] float32 -> [B, im_dim*im_dim] float32."""
    w1, b1, w2, b2, w3, b3 = params
    B, z_dim = x.shape
    out_dim = w3.shape[1]

    if block_b is None:
        block_b = _pick_block_b(B)

    # Only pad the batch if the caller forces a non-dividing tile size; the
    # default block_b choice avoids this entirely (no extra HBM pass).
    bp = ((B + block_b - 1) // block_b) * block_b
    if bp != B:
        x = jnp.pad(x, ((0, bp - B), (0, 0)))

    grid = (bp // block_b,)

    # Weights / biases: constant index_map -> fetched once, VMEM-resident.
    const = lambda a: pl.BlockSpec(a.shape, lambda i, _nd=a.ndim: (0,) * _nd)

    flops = 2 * bp * (z_dim * w1.shape[1]
                      + w2.shape[0] * w2.shape[1]
                      + w3.shape[0] * w3.shape[1])
    bytes_accessed = (x.size * x.dtype.itemsize
                      + sum(a.size * a.dtype.itemsize
                            for a in (w1, b1, w2, b2, w3, b3))
                      + bp * out_dim * 4)

    out = pl.pallas_call(
        generator_kernel,
        out_shape=jax.ShapeDtypeStruct((bp, out_dim), jnp.float32),
        grid_spec=pltpu.PrefetchScalarGridSpec(
            num_scalar_prefetch=0,
            grid=grid,
            in_specs=[
                # x streams over the batch; native z_dim (full-extent last dim).
                pl.BlockSpec((block_b, z_dim), lambda i: (i, 0)),
                const(w1), const(b1),
                const(w2), const(b2),
                const(w3), const(b3),
            ],
            out_specs=pl.BlockSpec((block_b, out_dim), lambda i: (i, 0)),
        ),
        compiler_params=pltpu.CompilerParams(
            # Batch tiles are independent -> shard across both TCs on v7x.
            dimension_semantics=("parallel",),
        ),
        cost_estimate=pl.CostEstimate(
            flops=flops,
            transcendentals=bp * out_dim,
            bytes_accessed=bytes_accessed,
        ),
    )(x, w1, b1, w2, b2, w3, b3)
    return out if bp == B else out[:B]


def init_params(key, z_dim, im_dim):
    """Mimics nn.Linear's U(-1/sqrt(fan_in), 1/sqrt(fan_in)) init.

    Weights stored pre-transposed as [in, out] in bf16; biases are 2-D
    [1, out] so they sit on the lane axis. Layer-1/2 biases are bf16 (they
    feed the bf16 epilogue); the final bias stays f32 for the tanh epilogue.
    """
    dims = [(z_dim, 128), (128, 512), (512, im_dim * im_dim)]
    params = []
    for li, (fan_in, fan_out) in enumerate(dims):
        key, kw, kb = jax.random.split(key, 3)
        bound = 1.0 / jnp.sqrt(fan_in)
        w = jax.random.uniform(kw, (fan_in, fan_out), jnp.float32, -bound, bound)
        b = jax.random.uniform(kb, (1, fan_out), jnp.float32, -bound, bound)
        b_dtype = jnp.bfloat16 if li < 2 else jnp.float32
        params.extend([w.astype(jnp.bfloat16), b.astype(b_dtype)])
    return tuple(params)


def reference_forward(x, params):
    """Pure-JAX reference with the same bf16/f32 mixed-precision recipe."""
    w1, b1, w2, b2, w3, b3 = params

    def dot_f32acc(a, w):
        return jnp.dot(a.astype(jnp.bfloat16), w,
                       preferred_element_type=jnp.float32)

    h1 = _leaky_relu(dot_f32acc(x, w1).astype(jnp.bfloat16) + b1)
    h2 = _leaky_relu(dot_f32acc(h1, w2).astype(jnp.bfloat16) + b2)
    return jnp.tanh(dot_f32acc(h2, w3) + b3)


if __name__ == "__main__":
    key = jax.random.PRNGKey(0)
    # B = 512 -> auto block_b = 256: two 256-row tiles (fills the 256x256 MXU
    # in M on v6e/v7x, keeps both v7x TCs busy, no batch pad/slice).
    # out features = im_dim*im_dim = 256 (lane-dense multiple of 128).
    B, z_dim, im_dim = 512, 64, 16

    key, kx = jax.random.split(key)
    x = jax.random.normal(kx, (B, z_dim), jnp.float32)
    params = init_params(key, z_dim, im_dim)

    out = generator_forward(x, params)
    jax.block_until_ready(out)

    ref = reference_forward(x, params)
    assert out.shape == (B, im_dim * im_dim)
    # bf16 matmul operands / bf16 hidden epilogues -> loosened tolerance.
    assert jnp.allclose(out, ref, atol=2e-2, rtol=2e-2)
    print("KERNEL_OK")
</pallas_src>

<mosaic_0001>
module attributes {stable_mosaic.version = 11 : i64} {
  func.func @generator_kernel(%arg0: i32, %arg1: memref<256x64xf32, #tpu.memory_space<vmem>>, %arg2: memref<64x128xbf16, #tpu.memory_space<vmem>>, %arg3: memref<1x128xbf16, #tpu.memory_space<vmem>>, %arg4: memref<128x512xbf16, #tpu.memory_space<vmem>>, %arg5: memref<1x512xbf16, #tpu.memory_space<vmem>>, %arg6: memref<512x256xbf16, #tpu.memory_space<vmem>>, %arg7: memref<1x256xf32, #tpu.memory_space<vmem>>, %arg8: memref<256x256xf32, #tpu.memory_space<vmem>>) attributes {dimension_semantics = [#tpu.dimension_semantics<parallel>], iteration_bounds = array<i64: 2>, scalar_prefetch = 0 : i64, scratch_operands = 0 : i64, tpu.core_type = #tpu.core_type<tc>, window_params = [{transform_indices = @transform_0, window_bounds = array<i64: 256, 64>}, {pipeline_mode = #tpu.pipeline_mode<synchronous>, transform_indices = @transform_1, window_bounds = array<i64: 64, 128>}, {pipeline_mode = #tpu.pipeline_mode<synchronous>, transform_indices = @transform_2, window_bounds = array<i64: 1, 128>}, {pipeline_mode = #tpu.pipeline_mode<synchronous>, transform_indices = @transform_3, window_bounds = array<i64: 128, 512>}, {pipeline_mode = #tpu.pipeline_mode<synchronous>, transform_indices = @transform_4, window_bounds = array<i64: 1, 512>}, {pipeline_mode = #tpu.pipeline_mode<synchronous>, transform_indices = @transform_5, window_bounds = array<i64: 512, 256>}, {pipeline_mode = #tpu.pipeline_mode<synchronous>, transform_indices = @transform_6, window_bounds = array<i64: 1, 256>}, {transform_indices = @transform_7, window_bounds = array<i64: 256, 256>}]} {
    %c0 = arith.constant 0 : index
    %c0_0 = arith.constant 0 : index
    %0 = vector.load %arg1[%c0, %c0_0] : memref<256x64xf32, #tpu.memory_space<vmem>>, vector<256x64xf32>
    %1 = arith.truncf %0 : vector<256x64xf32> to vector<256x64xbf16>
    %c0_1 = arith.constant 0 : index
    %c0_2 = arith.constant 0 : index
    %2 = vector.load %arg2[%c0_1, %c0_2] : memref<64x128xbf16, #tpu.memory_space<vmem>>, vector<64x128xbf16>
    %cst = arith.constant dense<0.000000e+00> : vector<256x128xf32>
    %3 = tpu.matmul %1, %2, %cst {dimension_numbers = #tpu.dot_dimension_numbers<[1], [0], [0], [1], [0, 0, 1, 1], [], []>} : vector<256x64xbf16>, vector<64x128xbf16>, vector<256x128xf32> -> vector<256x128xf32>
    %4 = arith.truncf %3 : vector<256x128xf32> to vector<256x128xbf16>
    %c0_3 = arith.constant 0 : index
    %c0_4 = arith.constant 0 : index
    %5 = vector.load %arg3[%c0_3, %c0_4] : memref<1x128xbf16, #tpu.memory_space<vmem>>, vector<1x128xbf16>
    %6 = vector.broadcast %5 : vector<1x128xbf16> to vector<256x128xbf16>
    %7 = arith.addf %4, %6 : vector<256x128xbf16>
    %cst_5 = arith.constant 1.000980e-02 : bf16
    %8 = vector.broadcast %cst_5 : bf16 to vector<256x128xbf16>
    %9 = arith.mulf %8, %7 : vector<256x128xbf16>
    %10 = arith.maximumf %7, %9 : vector<256x128xbf16>
    %c0_6 = arith.constant 0 : index
    %c0_7 = arith.constant 0 : index
    %11 = vector.load %arg4[%c0_6, %c0_7] : memref<128x512xbf16, #tpu.memory_space<vmem>>, vector<128x512xbf16>
    %cst_8 = arith.constant dense<0.000000e+00> : vector<256x512xf32>
    %12 = tpu.matmul %10, %11, %cst_8 {dimension_numbers = #tpu.dot_dimension_numbers<[1], [0], [0], [1], [0, 0, 1, 1], [], []>} : vector<256x128xbf16>, vector<128x512xbf16>, vector<256x512xf32> -> vector<256x512xf32>
    %13 = arith.truncf %12 : vector<256x512xf32> to vector<256x512xbf16>
    %c0_9 = arith.constant 0 : index
    %c0_10 = arith.constant 0 : index
    %14 = vector.load %arg5[%c0_9, %c0_10] : memref<1x512xbf16, #tpu.memory_space<vmem>>, vector<1x512xbf16>
    %15 = vector.broadcast %14 : vector<1x512xbf16> to vector<256x512xbf16>
    %16 = arith.addf %13, %15 : vector<256x512xbf16>
    %cst_11 = arith.constant 1.000980e-02 : bf16
    %17 = vector.broadcast %cst_11 : bf16 to vector<256x512xbf16>
    %18 = arith.mulf %17, %16 : vector<256x512xbf16>
    %19 = arith.maximumf %16, %18 : vector<256x512xbf16>
    %c0_12 = arith.constant 0 : index
    %c0_13 = arith.constant 0 : index
    %20 = vector.load %arg6[%c0_12, %c0_13] : memref<512x256xbf16, #tpu.memory_space<vmem>>, vector<512x256xbf16>
    %cst_14 = arith.constant dense<0.000000e+00> : vector<256x256xf32>
    %21 = tpu.matmul %19, %20, %cst_14 {dimension_numbers = #tpu.dot_dimension_numbers<[1], [0], [0], [1], [0, 0, 1, 1], [], []>} : vector<256x512xbf16>, vector<512x256xbf16>, vector<256x256xf32> -> vector<256x256xf32>
    %c0_15 = arith.constant 0 : index
    %c0_16 = arith.constant 0 : index
    %22 = vector.load %arg7[%c0_15, %c0_16] : memref<1x256xf32, #tpu.memory_space<vmem>>, vector<1x256xf32>
    %23 = vector.broadcast %22 : vector<1x256xf32> to vector<256x256xf32>
    %24 = arith.addf %21, %23 : vector<256x256xf32>
    %25 = math.tanh %24 : vector<256x256xf32>
    %c0_17 = arith.constant 0 : index
    %c0_18 = arith.constant 0 : index
    %26 = vector.load %arg8[%c0_17, %c0_18] : memref<256x256xf32, #tpu.memory_space<vmem>>, vector<256x256xf32>
    tpu.vector_store %arg8[%c0_17, %c0_18], %25 {strides = array<i32>} : memref<256x256xf32, #tpu.memory_space<vmem>>, vector<256x256xf32>,
    return
  }
  func.func @transform_0(%arg0: i32) -> (i32, i32) {
    %c0_i32 = arith.constant 0 : i32
    %c0_i32_0 = arith.constant 0 : i32
    return %arg0, %c0_i32 : i32, i32
  }
  func.func @transform_1(%arg0: i32) -> (i32, i32) {
    %c0_i32 = arith.constant 0 : i32
    %c0_i32_0 = arith.constant 0 : i32
    %c0_i32_1 = arith.constant 0 : i32
    return %c0_i32, %c0_i32_0 : i32, i32
  }
  func.func @transform_2(%arg0: i32) -> (i32, i32) {
    %c0_i32 = arith.constant 0 : i32
    %c0_i32_0 = arith.constant 0 : i32
    %c0_i32_1 = arith.constant 0 : i32
    return %c0_i32, %c0_i32_0 : i32, i32
  }
  func.func @transform_3(%arg0: i32) -> (i32, i32) {
    %c0_i32 = arith.constant 0 : i32
    %c0_i32_0 = arith.constant 0 : i32
    %c0_i32_1 = arith.constant 0 : i32
    return %c0_i32, %c0_i32_0 : i32, i32
  }
  func.func @transform_4(%arg0: i32) -> (i32, i32) {
    %c0_i32 = arith.constant 0 : i32
    %c0_i32_0 = arith.constant 0 : i32
    %c0_i32_1 = arith.constant 0 : i32
    return %c0_i32, %c0_i32_0 : i32, i32
  }
  func.func @transform_5(%arg0: i32) -> (i32, i32) {
    %c0_i32 = arith.constant 0 : i32
    %c0_i32_0 = arith.constant 0 : i32
    %c0_i32_1 = arith.constant 0 : i32
    return %c0_i32, %c0_i32_0 : i32, i32
  }
  func.func @transform_6(%arg0: i32) -> (i32, i32) {
    %c0_i32 = arith.constant 0 : i32
    %c0_i32_0 = arith.constant 0 : i32
    %c0_i32_1 = arith.constant 0 : i32
    return %c0_i32, %c0_i32_0 : i32, i32
  }
  func.func @transform_7(%arg0: i32) -> (i32, i32) {
    %c0_i32 = arith.constant 0 : i32
    %c0_i32_0 = arith.constant 0 : i32
    return %arg0, %c0_i32 : i32, i32
  }
}

</mosaic_0001>

<llo_original>
// kernel: tpu_custom_call.1
$region0: #{tpu_custom_call.1}
  #allocation0 [shape = 'u32[]', space=smem, size = 0x4, offset = 0x4, fixed_abs, tag = 'smem constant byte address 0x4 - core index']
  #allocation1 [shape = 'u32[144,128]{1,0:T(1,128)}', space=vmem, size = 0x12000, scoped, tag = 'internal scratch']
  %s0 = inlined_call_operand.vmem [shape: f32[512,64], index: 0, kind: input, shape index: {}]
  %s1 = inlined_call_operand.hbm [shape: bf16[64,128], index: 1, kind: input, shape index: {}]
  %s2 = inlined_call_operand.vmem [shape: bf16[1,128], index: 2, kind: input, shape index: {}]
  %s3 = inlined_call_operand.vmem [shape: bf16[128,512], index: 3, kind: input, shape index: {}]
  %s4 = inlined_call_operand.vmem [shape: bf16[1,512], index: 4, kind: input, shape index: {}]
  %s5 = inlined_call_operand.vmem [shape: bf16[512,256], index: 5, kind: input, shape index: {}]
  %s6 = inlined_call_operand.vmem [shape: f32[1,256], index: 6, kind: input, shape index: {}]
  %s7 = inlined_call_operand.hbm [shape: f32[512,256], index: 7, kind: output, shape index: {}]
  %s8 = sld [smem:[#allocation0]]
  $region65: #{tpu_custom_call.1} parent=0
    _
  %s10 = ssub.s32 1, %s8
  %s11 = scalar_select 0, %s10, %s8
  $region1: #{tpu_custom_call.1} parent=0
    #allocation2 [shape = 'u8[16384]{0}', space=vmem, size = 0x4000, scoped, tag = 'input window, operand 1, single buffered']
    #allocation3 [shape = 's32[2]{0}', space=sflag, size = 0x8, scoped, tag = 'scoped memory for tpu_custom_call.1']
    #allocation4 [shape = 's32[2]{0}', space=sflag, size = 0x8, scoped, tag = 'scoped memory for tpu_custom_call.1']
    #allocation5 [shape = 'u8[524288]{0}', space=vmem, size = 0x80000, scoped, tag = 'output window, operand 0']
    %12 = vsyncpa [#allocation3], 0
    %13 = vsyncpa [#allocation4], 0
    %s14 = scalar_lea.sflag [#allocation4], 1
    %15 = vsyncpa %s14, 0
    loop: start=0, step=1, limit=4
    $region2: #{tpu_custom_call.1} parent=1 // loop_pre_header
      _
    $region3: #{tpu_custom_call.1} parent=1 // loop_header
      %s17 = sphi 0, %s21
      %p18 = scmp.ge.s32.totalorder %s17, 4
      %s27 = sphi 0, %s29
      %s30 = sphi 0, %s27
      %s31 = sphi 0, %s30
      %s47 = sphi 0, %s31
      %s51 = sphi 0, %s51
      %s53 = sphi 0, %s51
      %s54 = sphi 0, %s53
      %s68 = sphi 0, %s54
      %s72 = sphi 0, %s72
      %s74 = sphi 0, %s72
      %s75 = sphi 0, %s74
      %s89 = sphi 0, %s75
      %s93 = sphi 0, %s93
      %s95 = sphi 0, %s93
      %s96 = sphi 0, %s95
      %s110 = sphi 0, %s96
      %s114 = sphi 0, %s114
      %s116 = sphi 0, %s114
      %s117 = sphi 0, %s116
      %s131 = sphi 0, %s117
      %s135 = sphi 0, %s135
      %s137 = sphi 0, %s135
      %s138 = sphi 0, %s137
      %s152 = sphi 0, %s138
      %s156 = sphi 0, %s156
      %s158 = sphi 0, %s156
      %s159 = sphi 0, %s158
      %s173 = sphi 0, %s159
      %s179 = sphi 0, %s181
      %s182 = sphi 0, %s179
      %s183 = sphi 0, %s182
      %s199 = sphi 0, %s183
    $region4: #{tpu_custom_call.1} parent=1 // loop_header_branch
      %20 = sbr.rel (%p18) target = $region8
    $region5: #{tpu_custom_call.1} parent=1 // loop_body
      %s22 = ssub.s32 %s17, 1
      %s23 = ssub.s32 %s17, 2
      %s24 = sadd.s32 %s17, 1
      %s25 = ssub.s32 %s17, %s24
      %p26 = scmp.eq.s32.totalorder %s25, 0
      %s28 = sadd.s32 %s27, 1
      %s29 = scalar_select %p26, %s27, %s28
      %p32 = pneg %p26
      %p33 = scmp.eq.s32.totalorder %s17, 1
      %p34 = por %p32, %p33
      %p35 = scmp.ne.s32.totalorder %s27, %s30
      %p36 = scmp.eq.s32.totalorder %s17, 0
      %p37 = por %p35, %p36
      %p38 = scmp.ne.s32.totalorder %s27, %s30
      %p39 = scmp.eq.s32.totalorder %s22, 1
      %p40 = por %p38, %p39
      %p41 = scmp.ne.s32.totalorder %s30, %s31
      %p42 = scmp.eq.s32.totalorder %s22, 0
      %p43 = por %p41, %p42
      %p44 = scmp.ne.s32.totalorder %s30, %s31
      %p45 = scmp.eq.s32.totalorder %s23, 1
      %p46 = por %p44, %p45
      %p48 = scmp.ne.s32.totalorder %s31, %s47
      %p49 = scmp.eq.s32.totalorder %s23, 0
      %p50 = por %p48, %p49
      %s52 = sadd.s32 %s51, 1
      %p55 = scmp.eq.s32.totalorder %s17, 1
      %p56 = scmp.ne.s32.totalorder %s51, %s53
      %p57 = scmp.eq.s32.totalorder %s17, 0
      %p58 = por %p56, %p57
      %p59 = scmp.ne.s32.totalorder %s51, %s53
      %p60 = scmp.eq.s32.totalorder %s22, 1
      %p61 = por %p59, %p60
      %p62 = scmp.ne.s32.totalorder %s53, %s54
      %p63 = scmp.eq.s32.totalorder %s22, 0
      %p64 = por %p62, %p63
      %p65 = scmp.ne.s32.totalorder %s53, %s54
      %p66 = scmp.eq.s32.totalorder %s23, 1
      %p67 = por %p65, %p66
      %p69 = scmp.ne.s32.totalorder %s54, %s68
      %p70 = scmp.eq.s32.totalorder %s23, 0
      %p71 = por %p69, %p70
      %s73 = sadd.s32 %s72, 1
      %p76 = scmp.eq.s32.totalorder %s17, 1
      %p77 = scmp.ne.s32.totalorder %s72, %s74
      %p78 = scmp.eq.s32.totalorder %s17, 0
      %p79 = por %p77, %p78
      %p80 = scmp.ne.s32.totalorder %s72, %s74
      %p81 = scmp.eq.s32.totalorder %s22, 1
      %p82 = por %p80, %p81
      %p83 = scmp.ne.s32.totalorder %s74, %s75
      %p84 = scmp.eq.s32.totalorder %s22, 0
      %p85 = por %p83, %p84
      %p86 = scmp.ne.s32.totalorder %s74, %s75
      %p87 = scmp.eq.s32.totalorder %s23, 1
      %p88 = por %p86, %p87
      %p90 = scmp.ne.s32.totalorder %s75, %s89
      %p91 = scmp.eq.s32.totalorder %s23, 0
      %p92 = por %p90, %p91
      %s94 = sadd.s32 %s93, 1
      %p97 = scmp.eq.s32.totalorder %s17, 1
      %p98 = scmp.ne.s32.totalorder %s93, %s95
      %p99 = scmp.eq.s32.totalorder %s17, 0
      %p100 = por %p98, %p99
      %p101 = scmp.ne.s32.totalorder %s93, %s95
      %p102 = scmp.eq.s32.totalorder %s22, 1
      %p103 = por %p101, %p102
      %p104 = scmp.ne.s32.totalorder %s95, %s96
      %p105 = scmp.eq.s32.totalorder %s22, 0
      %p106 = por %p104, %p105
      %p107 = scmp.ne.s32.totalorder %s95, %s96
      %p108 = scmp.eq.s32.totalorder %s23, 1
      %p109 = por %p107, %p108
      %p111 = scmp.ne.s32.totalorder %s96, %s110
      %p112 = scmp.eq.s32.totalorder %s23, 0
      %p113 = por %p111, %p112
      %s115 = sadd.s32 %s114, 1
      %p118 = scmp.eq.s32.totalorder %s17, 1
      %p119 = scmp.ne.s32.totalorder %s114, %s116
      %p120 = scmp.eq.s32.totalorder %s17, 0
      %p121 = por %p119, %p120
      %p122 = scmp.ne.s32.totalorder %s114, %s116
      %p123 = scmp.eq.s32.totalorder %s22, 1
      %p124 = por %p122, %p123
      %p125 = scmp.ne.s32.totalorder %s116, %s117
      %p126 = scmp.eq.s32.totalorder %s22, 0
      %p127 = por %p125, %p126
      %p128 = scmp.ne.s32.totalorder %s116, %s117
      %p129 = scmp.eq.s32.totalorder %s23, 1
      %p130 = por %p128, %p129
      %p132 = scmp.ne.s32.totalorder %s117, %s131
      %p133 = scmp.eq.s32.totalorder %s23, 0
      %p134 = por %p132, %p133
      %s136 = sadd.s32 %s135, 1
      %p139 = scmp.eq.s32.totalorder %s17, 1
      %p140 = scmp.ne.s32.totalorder %s135, %s137
      %p141 = scmp.eq.s32.totalorder %s17, 0
      %p142 = por %p140, %p141
      %p143 = scmp.ne.s32.totalorder %s135, %s137
      %p144 = scmp.eq.s32.totalorder %s22, 1
      %p145 = por %p143, %p144
      %p146 = scmp.ne.s32.totalorder %s137, %s138
      %p147 = scmp.eq.s32.totalorder %s22, 0
      %p148 = por %p146, %p147
      %p149 = scmp.ne.s32.totalorder %s137, %s138
      %p150 = scmp.eq.s32.totalorder %s23, 1
      %p151 = por %p149, %p150
      %p153 = scmp.ne.s32.totalorder %s138, %s152
      %p154 = scmp.eq.s32.totalorder %s23, 0
      %p155 = por %p153, %p154
      %s157 = sadd.s32 %s156, 1
      %p160 = scmp.eq.s32.totalorder %s17, 1
      %p161 = scmp.ne.s32.totalorder %s156, %s158
      %p162 = scmp.eq.s32.totalorder %s17, 0
      %p163 = por %p161, %p162
      %p164 = scmp.ne.s32.totalorder %s156, %s158
      %p165 = scmp.eq.s32.totalorder %s22, 1
      %p166 = por %p164, %p165
      %p167 = scmp.ne.s32.totalorder %s158, %s159
      %p168 = scmp.eq.s32.totalorder %s22, 0
      %p169 = por %p167, %p168
      %p170 = scmp.ne.s32.totalorder %s158, %s159
      %p171 = scmp.eq.s32.totalorder %s23, 1
      %p172 = por %p170, %p171
      %p174 = scmp.ne.s32.totalorder %s159, %s173
      %p175 = scmp.eq.s32.totalorder %s23, 0
      %p176 = por %p174, %p175
      %s177 = ssub.s32 %s17, %s24
      %p178 = scmp.eq.s32.totalorder %s177, 0
      %s180 = sadd.s32 %s179, 1
      %s181 = scalar_select %p178, %s179, %s180
      %p184 = pneg %p178
      %p185 = scmp.eq.s32.totalorder %s17, 1
      %p186 = por %p184, %p185
      %p187 = scmp.ne.s32.totalorder %s179, %s182
      %p188 = scmp.eq.s32.totalorder %s17, 0
      %p189 = por %p187, %p188
      %p190 = scmp.ne.s32.totalorder %s179, %s182
      %p191 = scmp.eq.s32.totalorder %s22, 1
      %p192 = por %p190, %p191
      %p193 = scmp.ne.s32.totalorder %s182, %s183
      %p194 = scmp.eq.s32.totalorder %s22, 0
      %p195 = por %p193, %p194
      %p196 = scmp.ne.s32.totalorder %s182, %s183
      %p197 = scmp.eq.s32.totalorder %s23, 1
      %p198 = por %p196, %p197
      %p200 = scmp.ne.s32.totalorder %s183, %s199
      %p201 = scmp.eq.s32.totalorder %s23, 0
      %p202 = por %p200, %p201
      %p203 = scmp.le.s32.totalorder 1, %s17
      %p204 = scmp.lt.s32.totalorder %s17, 3
      %p205 = pnand %p203, %p204
      %p206 = pneg %p205
      // Predicated region
      $region9: #{tpu_custom_call.1} parent=5 // pred_check
        _
      $region10: #{tpu_custom_call.1} parent=5 // pred_check_branch
        %208 = sbr.rel (%p205) target = $region12
      $region11: #{tpu_custom_call.1} parent=5 // pred_region
        %s209 = ssub.s32 %s17, 1
        // Predicated region
        $region13: #{tpu_custom_call.1} parent=11 // pred_check
          %p210 = pneg %p64
        $region14: #{tpu_custom_call.1} parent=11 // pred_check_branch
          %212 = sbr.rel (%p210) target = $region16
        $region15: #{tpu_custom_call.1} parent=11 // pred_region
          %s214 = ssub.s32 512, 512
          %215 = vsyncadd [#allocation3], %s214
          %s216 = sshll.u32 [#allocation2], 4
          %s217 = int_to_ptr.vmem [resolvable:$true] %s216
          %222 = dma.hbm_to_vmem [thread:$0]  %s1, 512, %s217, [#allocation3], 64, 64, 4
        $region16: #{tpu_custom_call.1} parent=11 // pred_fallthru
          _
        // Predicated region
        $region17: #{tpu_custom_call.1} parent=11 // pred_check
          %p223 = pneg %p85
        $region18: #{tpu_custom_call.1} parent=11 // pred_check_branch
          %225 = sbr.rel (%p223) target = $region20
        $region19: #{tpu_custom_call.1} parent=11 // pred_region
          _
        $region20: #{tpu_custom_call.1} parent=11 // pred_fallthru
          _
        // Predicated region
        $region21: #{tpu_custom_call.1} parent=11 // pred_check
          %p226 = pneg %p106
        $region22: #{tpu_custom_call.1} parent=11 // pred_check_branch
          %228 = sbr.rel (%p226) target = $region24
        $region23: #{tpu_custom_call.1} parent=11 // pred_region
          _
        $region24: #{tpu_custom_call.1} parent=11 // pred_fallthru
          _
        // Predicated region
        $region25: #{tpu_custom_call.1} parent=11 // pred_check
          %p229 = pneg %p127
        $region26: #{tpu_custom_call.1} parent=11 // pred_check_branch
          %231 = sbr.rel (%p229) target = $region28
        $region27: #{tpu_custom_call.1} parent=11 // pred_region
          _
        $region28: #{tpu_custom_call.1} parent=11 // pred_fallthru
          _
        // Predicated region
        $region29: #{tpu_custom_call.1} parent=11 // pred_check
          %p232 = pneg %p148
        $region30: #{tpu_custom_call.1} parent=11 // pred_check_branch
          %234 = sbr.rel (%p232) target = $region32
        $region31: #{tpu_custom_call.1} parent=11 // pred_region
          _
        $region32: #{tpu_custom_call.1} parent=11 // pred_fallthru
          _
        // Predicated region
        $region33: #{tpu_custom_call.1} parent=11 // pred_check
          %p235 = pneg %p169
        $region34: #{tpu_custom_call.1} parent=11 // pred_check_branch
          %237 = sbr.rel (%p235) target = $region36
        $region35: #{tpu_custom_call.1} parent=11 // pred_region
          _
        $region36: #{tpu_custom_call.1} parent=11 // pred_fallthru
          _
      $region12: #{tpu_custom_call.1} parent=5 // pred_fallthru
        _
      %p238 = scmp.lt.s32.totalorder %s17, 2
      // Predicated region
      $region37: #{tpu_custom_call.1} parent=5 // pred_check
        %p239 = pneg %p238
      $region38: #{tpu_custom_call.1} parent=5 // pred_check_branch
        %241 = sbr.rel (%p239) target = $region40
      $region39: #{tpu_custom_call.1} parent=5 // pred_region
        // Predicated region
        $region41: #{tpu_custom_call.1} parent=39 // pred_check
          %p242 = pneg %p37
        $region42: #{tpu_custom_call.1} parent=39 // pred_check_branch
          %244 = sbr.rel (%p242) target = $region44
        $region43: #{tpu_custom_call.1} parent=39 // pred_region
          %s245 = smul.u32 32, %s17
          %p246 = scmp.lt.s32.totalorder %s245, 63
          %s247 = scalar_select %p246, %s245, 63
          %s248 = smul.addr %s247, 8
          %s249 = scalar_lea.vmem %s0, %s248
          %s250 = smul.u32 32, %s17
        $region44: #{tpu_custom_call.1} parent=39 // pred_fallthru
          _
      $region40: #{tpu_custom_call.1} parent=5 // pred_fallthru
        _
      %p251 = scmp.le.s32.totalorder 1, %s17
      %p252 = scmp.lt.s32.totalorder %s17, 3
      %p253 = pnand %p251, %p252
      %p254 = pneg %p253
      // Predicated region
      $region45: #{tpu_custom_call.1} parent=5 // pred_check
        _
      $region46: #{tpu_custom_call.1} parent=5 // pred_check_branch
        %256 = sbr.rel (%p253) target = $region48
      $region47: #{tpu_custom_call.1} parent=5 // pred_region
        %s257 = ssub.s32 %s17, 1
        // Predicated region
        $region49: #{tpu_custom_call.1} parent=47 // pred_check
          %p258 = pneg %p64
        $region50: #{tpu_custom_call.1} parent=47 // pred_check_branch
          %260 = sbr.rel (%p258) target = $region52
        $region51: #{tpu_custom_call.1} parent=47 // pred_region
          %261 = dma.done [#allocation3], 512
        $region52: #{tpu_custom_call.1} parent=47 // pred_fallthru
          _
        %s262 = smul.u32 32, %s22
        %p263 = scmp.lt.s32.totalorder %s262, 63
        %s264 = scalar_select %p263, %s262, 63
        %s265 = smul.addr %s264, 8
        %s266 = scalar_lea.vmem %s0, %s265
        %p267 = pneg %p43
        %p268 = pneg %p40
        %p269 = pneg %p64
        %p270 = pneg %p61
        %p271 = pneg %p85
        %p272 = pneg %p82
        %p273 = pneg %p106
        %p274 = pneg %p103
        %p275 = pneg %p127
        %p276 = pneg %p124
        %p277 = pneg %p148
        %p278 = pneg %p145
        %p279 = pneg %p169
        %p280 = pneg %p166
        %p281 = pneg %p195
        %p282 = pneg %p192
        %s283 = sand.u32 %s182, 1
        %s284 = scalar_lea.sflag [#allocation4], %s283
        %s285 = sand.u32 %s182, 1
        %s286 = smul.addr %s285, 512
        %s287 = scalar_lea.vmem [#allocation5], %s286
        %s288 = smul.u32 32, %s22
        %p289 = scmp.lt.s32.totalorder %s288, 63
        %s290 = scalar_select %p289, %s288, 63
        %s291 = smul.addr %s290, 8
        %s292 = scalar_lea.vmem %s0, %s291
        %s293 = smul.u32 32, %s22
        %s294 = smul.u32 32, %s22
        %v297 = vld [vmem:[%s292] sm:$0xff]
        %v298 = vld [vmem:[%s292 + $0x8] sm:$0xff]
        %v299 = vld [vmem:[%s292 + $0x10] sm:$0xff]
        %v300 = vld [vmem:[%s292 + $0x18] sm:$0xff]
        %v301 = vld [vmem:[%s292 + $0x20] sm:$0xff]
        %v302 = vld [vmem:[%s292 + $0x28] sm:$0xff]
        %v303 = vld [vmem:[%s292 + $0x30] sm:$0xff]
        %v304 = vld [vmem:[%s292 + $0x38] sm:$0xff]
        %v305 = vld [vmem:[%s292 + $0x40] sm:$0xff]
        %v306 = vld [vmem:[%s292 + $0x48] sm:$0xff]
        %v307 = vld [vmem:[%s292 + $0x50] sm:$0xff]
        %v308 = vld [vmem:[%s292 + $0x58] sm:$0xff]
        %v309 = vld [vmem:[%s292 + $0x60] sm:$0xff]
        %v310 = vld [vmem:[%s292 + $0x68] sm:$0xff]
        %v311 = vld [vmem:[%s292 + $0x70] sm:$0xff]
        %v312 = vld [vmem:[%s292 + $0x78] sm:$0xff]
        %v313 = vld [vmem:[%s292 + $0x80] sm:$0xff]
        %v314 = vld [vmem:[%s292 + $0x88] sm:$0xff]
        %v315 = vld [vmem:[%s292 + $0x90] sm:$0xff]
        %v316 = vld [vmem:[%s292 + $0x98] sm:$0xff]
        %v317 = vld [vmem:[%s292 + $0xa0] sm:$0xff]
        %v318 = vld [vmem:[%s292 + $0xa8] sm:$0xff]
        %v319 = vld [vmem:[%s292 + $0xb0] sm:$0xff]
        %v320 = vld [vmem:[%s292 + $0xb8] sm:$0xff]
        %v321 = vld [vmem:[%s292 + $0xc0] sm:$0xff]
        %v322 = vld [vmem:[%s292 + $0xc8] sm:$0xff]
        %v323 = vld [vmem:[%s292 + $0xd0] sm:$0xff]
        %v324 = vld [vmem:[%s292 + $0xd8] sm:$0xff]
        %v325 = vld [vmem:[%s292 + $0xe0] sm:$0xff]
        %v326 = vld [vmem:[%s292 + $0xe8] sm:$0xff]
        %v327 = vld [vmem:[%s292 + $0xf0] sm:$0xff]
        %v328 = vld [vmem:[%s292 + $0xf8] sm:$0xff]
        %v329 = vpack.c.bf16 %v298, %v297
        %v330 = vpack.c.bf16 %v300, %v299
        %v331 = vpack.c.bf16 %v302, %v301
        %v332 = vpack.c.bf16 %v304, %v303
        %v333 = vpack.c.bf16 %v306, %v305
        %v334 = vpack.c.bf16 %v308, %v307
        %v335 = vpack.c.bf16 %v310, %v309
        %v336 = vpack.c.bf16 %v312, %v311
        %v337 = vpack.c.bf16 %v314, %v313
        %v338 = vpack.c.bf16 %v316, %v315
        %v339 = vpack.c.bf16 %v318, %v317
        %v340 = vpack.c.bf16 %v320, %v319
        %v341 = vpack.c.bf16 %v322, %v321
        %v342 = vpack.c.bf16 %v324, %v323
        %v343 = vpack.c.bf16 %v326, %v325
        %v344 = vpack.c.bf16 %v328, %v327
        %v345 = vld [vmem:[#allocation2] sm:$0xf]
        %v346 = vld [vmem:[#allocation2 + $0x4] sm:$0xf]
        %v347 = vld [vmem:[#allocation2 + $0x8] sm:$0xf]
        %v348 = vld [vmem:[#allocation2 + $0xc] sm:$0xf]
        %v349 = vld [vmem:[#allocation2 + $0x10] sm:$0xf]
        %v350 = vld [vmem:[#allocation2 + $0x14] sm:$0xf]
        %v351 = vld [vmem:[#allocation2 + $0x18] sm:$0xf]
        %v352 = vld [vmem:[#allocation2 + $0x1c] sm:$0xf]
        %v361 = vunpack.c.l.b16 %v345
        %v362 = vunpack.c.l.b16 %v346
        %v363 = vunpack.c.l.b16 %v347
        %v364 = vunpack.c.l.b16 %v348
        %v365 = vunpack.c.l.b16 %v349
        %v366 = vunpack.c.l.b16 %v350
        %v367 = vunpack.c.l.b16 %v351
        %v368 = vunpack.c.l.b16 %v352
        %v369 = vpack.c.b16 %v362, %v361
        %v370 = vpack.c.b16 %v364, %v363
        %v371 = vpack.c.b16 %v366, %v365
        %v372 = vpack.c.b16 %v368, %v367
        %vm377 = vcmask 523264
        %v379 = vsel %vm377, %v329, 0
        %v382 = vsel %vm377, %v330, 0
        %v385 = vsel %vm377, %v331, 0
        %v388 = vsel %vm377, %v332, 0
        %v391 = vsel %vm377, %v333, 0
        %v394 = vsel %vm377, %v334, 0
        %v397 = vsel %vm377, %v335, 0
        %v400 = vsel %vm377, %v336, 0
        %v403 = vsel %vm377, %v337, 0
        %v406 = vsel %vm377, %v338, 0
        %v409 = vsel %vm377, %v339, 0
        %v412 = vsel %vm377, %v340, 0
        %v415 = vsel %vm377, %v341, 0
        %v418 = vsel %vm377, %v342, 0
        %v421 = vsel %vm377, %v343, 0
        %v424 = vsel %vm377, %v344, 0
        %426 = vmatprep.subr.bf16.mxu0 0
        %427 = vmatpush1.bf16.msra.mxu0 0
        %428 = vmatprep.subr.bf16.mxu0 0
        %429 = vmatpush1.bf16.msra.mxu0 0
        %430 = vmatprep.subr.bf16.mxu0 0
        %431 = vmatpush1.bf16.msra.mxu0 0
        %432 = vmatprep.subr.bf16.mxu0 0
        %433 = vmatpush1.bf16.msra.mxu0 0
        %434 = vmatprep.subr.bf16.mxu0 0
        %435 = vmatpush1.bf16.msra.mxu0 %v372
        %436 = vmatprep.subr.bf16.mxu0 0
        %437 = vmatpush1.bf16.msra.mxu0 %v371
        %438 = vmatprep.subr.bf16.mxu0 0
        %439 = vmatpush1.bf16.msra.mxu0 %v370
        %440 = vmatprep.subr.bf16.mxu0 0
        %441 = vmatpush1.bf16.msra.mxu0 %v369
        %442 = vmatprep.subr.bf16.mxu0 0
        %443 = vmatpush2.bf16.msra.mxu0 0
        %444 = vmatprep.subr.bf16.mxu0 0
        %445 = vmatpush2.bf16.msra.mxu0 0
        %446 = vmatprep.subr.bf16.mxu0 0
        %447 = vmatpush2.bf16.msra.mxu0 0
        %448 = vmatprep.subr.bf16.mxu0 0
        %449 = vmatpush2.bf16.msra.mxu0 0
        %450 = vmatprep.subr.bf16.mxu0 0
        %451 = vmatpush2.bf16.msra.mxu0 0
        %452 = vmatprep.subr.bf16.mxu0 0
        %453 = vmatpush2.bf16.msra.mxu0 0
        %454 = vmatprep.subr.bf16.mxu0 0
        %455 = vmatpush2.bf16.msra.mxu0 0
        %456 = vmatprep.subr.bf16.mxu0 0
        %457 = vmatpush2.bf16.msra.mxu0 0
        %458 = vmatprep.mubr.bf16.mxu0 0
        %459 = vmatmul.mubr.bf16.gmra.mxu0 %v379
        %v460 = vpop.f32.mrf.mxu0
        %v461 = vadd.f32 0.0, %v460
        %v462 = vpop.f32.mrf.mxu0
        %v463 = vpop.f32.mrf.mxu0
        %v464 = vadd.f32 0.0, %v463
        %v465 = vpop.f32.mrf.mxu0
        %466 = vmatprep.mubr.bf16.mxu0 0
        %467 = vmatmul.mubr.bf16.gmra.mxu0 %v382
        %v468 = vpop.f32.mrf.mxu0
        %v469 = vadd.f32 0.0, %v468
        %v470 = vpop.f32.mrf.mxu0
        %v471 = vpop.f32.mrf.mxu0
        %v472 = vadd.f32 0.0, %v471
        %v473 = vpop.f32.mrf.mxu0
        %474 = vmatprep.mubr.bf16.mxu0 0
        %475 = vmatmul.mubr.bf16.gmra.mxu0 %v385
        %v476 = vpop.f32.mrf.mxu0
        %v477 = vadd.f32 0.0, %v476
        %v478 = vpop.f32.mrf.mxu0
        %v479 = vpop.f32.mrf.mxu0
        %v480 = vadd.f32 0.0, %v479
        %v481 = vpop.f32.mrf.mxu0
        %482 = vmatprep.mubr.bf16.mxu0 0
        %483 = vmatmul.mubr.bf16.gmra.mxu0 %v388
        %v484 = vpop.f32.mrf.mxu0
        %v485 = vadd.f32 0.0, %v484
        %v486 = vpop.f32.mrf.mxu0
        %v487 = vpop.f32.mrf.mxu0
        %v488 = vadd.f32 0.0, %v487
        %v489 = vpop.f32.mrf.mxu0
        %490 = vmatprep.mubr.bf16.mxu0 0
        %491 = vmatmul.mubr.bf16.gmra.mxu0 %v391
        %v492 = vpop.f32.mrf.mxu0
        %v493 = vadd.f32 0.0, %v492
        %v494 = vpop.f32.mrf.mxu0
        %v495 = vpop.f32.mrf.mxu0
        %v496 = vadd.f32 0.0, %v495
        %v497 = vpop.f32.mrf.mxu0
        %498 = vmatprep.mubr.bf16.mxu0 0
        %499 = vmatmul.mubr.bf16.gmra.mxu0 %v394
        %v500 = vpop.f32.mrf.mxu0
        %v501 = vadd.f32 0.0, %v500
        %v502 = vpop.f32.mrf.mxu0
        %v503 = vpop.f32.mrf.mxu0
        %v504 = vadd.f32 0.0, %v503
        %v505 = vpop.f32.mrf.mxu0
        %506 = vmatprep.mubr.bf16.mxu0 0
        %507 = vmatmul.mubr.bf16.gmra.mxu0 %v397
        %v508 = vpop.f32.mrf.mxu0
        %v509 = vadd.f32 0.0, %v508
        %v510 = vpop.f32.mrf.mxu0
        %v511 = vpop.f32.mrf.mxu0
        %v512 = vadd.f32 0.0, %v511
        %v513 = vpop.f32.mrf.mxu0
        %514 = vmatprep.mubr.bf16.mxu0 0
        %515 = vmatmul.mubr.bf16.gmra.mxu0 %v400
        %v516 = vpop.f32.mrf.mxu0
        %v517 = vadd.f32 0.0, %v516
        %v518 = vpop.f32.mrf.mxu0
        %v519 = vpop.f32.mrf.mxu0
        %v520 = vadd.f32 0.0, %v519
        %v521 = vpop.f32.mrf.mxu0
        %522 = vmatprep.mubr.bf16.mxu0 0
        %523 = vmatmul.mubr.bf16.gmra.mxu0 %v403
        %v524 = vpop.f32.mrf.mxu0
        %v525 = vadd.f32 0.0, %v524
        %v526 = vpop.f32.mrf.mxu0
        %v527 = vpop.f32.mrf.mxu0
        %v528 = vadd.f32 0.0, %v527
        %v529 = vpop.f32.mrf.mxu0
        %530 = vmatprep.mubr.bf16.mxu0 0
        %531 = vmatmul.mubr.bf16.gmra.mxu0 %v406
        %v532 = vpop.f32.mrf.mxu0
        %v533 = vadd.f32 0.0, %v532
        %v534 = vpop.f32.mrf.mxu0
        %v535 = vpop.f32.mrf.mxu0
        %v536 = vadd.f32 0.0, %v535
        %v537 = vpop.f32.mrf.mxu0
        %538 = vmatprep.mubr.bf16.mxu0 0
        %539 = vmatmul.mubr.bf16.gmra.mxu0 %v409
        %v540 = vpop.f32.mrf.mxu0
        %v541 = vadd.f32 0.0, %v540
        %v542 = vpop.f32.mrf.mxu0
        %v543 = vpop.f32.mrf.mxu0
        %v544 = vadd.f32 0.0, %v543
        %v545 = vpop.f32.mrf.mxu0
        %546 = vmatprep.mubr.bf16.mxu0 0
        %547 = vmatmul.mubr.bf16.gmra.mxu0 %v412
        %v548 = vpop.f32.mrf.mxu0
        %v549 = vadd.f32 0.0, %v548
        %v550 = vpop.f32.mrf.mxu0
        %v551 = vpop.f32.mrf.mxu0
        %v552 = vadd.f32 0.0, %v551
        %v553 = vpop.f32.mrf.mxu0
        %554 = vmatprep.mubr.bf16.mxu0 0
        %555 = vmatmul.mubr.bf16.gmra.mxu0 %v415
        %v556 = vpop.f32.mrf.mxu0
        %v557 = vadd.f32 0.0, %v556
        %v558 = vpop.f32.mrf.mxu0
        %v559 = vpop.f32.mrf.mxu0
        %v560 = vadd.f32 0.0, %v559
        %v561 = vpop.f32.mrf.mxu0
        %562 = vmatprep.mubr.bf16.mxu0 0
        %563 = vmatmul.mubr.bf16.gmra.mxu0 %v418
        %v564 = vpop.f32.mrf.mxu0
        %v565 = vadd.f32 0.0, %v564
        %v566 = vpop.f32.mrf.mxu0
        %v567 = vpop.f32.mrf.mxu0
        %v568 = vadd.f32 0.0, %v567
        %v569 = vpop.f32.mrf.mxu0
        %570 = vmatprep.mubr.bf16.mxu0 0
        %571 = vmatmul.mubr.bf16.gmra.mxu0 %v421
        %v572 = vpop.f32.mrf.mxu0
        %v573 = vadd.f32 0.0, %v572
        %v574 = vpop.f32.mrf.mxu0
        %v575 = vpop.f32.mrf.mxu0
        %v576 = vadd.f32 0.0, %v575
        %v577 = vpop.f32.mrf.mxu0
        %578 = vmatprep.mubr.bf16.mxu0 0
        %579 = vmatmul.mubr.bf16.gmra.mxu0 %v424
        %v580 = vpop.f32.mrf.mxu0
        %v581 = vadd.f32 0.0, %v580
        %v582 = vpop.f32.mrf.mxu0
        %v583 = vpop.f32.mrf.mxu0
        %v584 = vadd.f32 0.0, %v583
        %v585 = vpop.f32.mrf.mxu0
        %586 = vdwg.mxu0
        %v587 = vpack.c.bf16 %v464, %v461
        %v588 = vpack.c.bf16 %v472, %v469
        %v589 = vpack.c.bf16 %v480, %v477
        %v590 = vpack.c.bf16 %v488, %v485
        %v591 = vpack.c.bf16 %v496, %v493
        %v592 = vpack.c.bf16 %v504, %v501
        %v593 = vpack.c.bf16 %v512, %v509
        %v594 = vpack.c.bf16 %v520, %v517
        %v595 = vpack.c.bf16 %v528, %v525
        %v596 = vpack.c.bf16 %v536, %v533
        %v597 = vpack.c.bf16 %v544, %v541
        %v598 = vpack.c.bf16 %v552, %v549
        %v599 = vpack.c.bf16 %v560, %v557
        %v600 = vpack.c.bf16 %v568, %v565
        %v601 = vpack.c.bf16 %v576, %v573
        %v602 = vpack.c.bf16 %v584, %v581
        %v603 = vld [vmem:[%s2] sm:$0x1]
        %v605 = vpack.i.b16 %v603, %v603
        %v607 = vlaneseq
        %v608 = vshrl.u32 %v607, 7
        %v609 = vsub.s32 0, %v608
        %v610 = vrot.slane %v605, %v609
        %v611 = vadd.bf16 %v587, %v610
        %v612 = vadd.bf16 %v588, %v610
        %v613 = vadd.bf16 %v589, %v610
        %v614 = vadd.bf16 %v590, %v610
        %v615 = vadd.bf16 %v591, %v610
        %v616 = vadd.bf16 %v592, %v610
        %v617 = vadd.bf16 %v593, %v610
        %v618 = vadd.bf16 %v594, %v610
        %v619 = vadd.bf16 %v595, %v610
        %v620 = vadd.bf16 %v596, %v610
        %v621 = vadd.bf16 %v597, %v610
        %v622 = vadd.bf16 %v598, %v610
        %v623 = vadd.bf16 %v599, %v610
        %v624 = vadd.bf16 %v600, %v610
        %v625 = vadd.bf16 %v601, %v610
        %v626 = vadd.bf16 %v602, %v610
        %v627 = vmul.bf16 %v611, 1009007652
        %v628 = vmul.bf16 %v612, 1009007652
        %v629 = vmul.bf16 %v613, 1009007652
        %v630 = vmul.bf16 %v614, 1009007652
        %v631 = vmul.bf16 %v615, 1009007652
        %v632 = vmul.bf16 %v616, 1009007652
        %v633 = vmul.bf16 %v617, 1009007652
        %v634 = vmul.bf16 %v618, 1009007652
        %v635 = vmul.bf16 %v619, 1009007652
        %v636 = vmul.bf16 %v620, 1009007652
        %v637 = vmul.bf16 %v621, 1009007652
        %v638 = vmul.bf16 %v622, 1009007652
        %v639 = vmul.bf16 %v623, 1009007652
        %v640 = vmul.bf16 %v624, 1009007652
        %v641 = vmul.bf16 %v625, 1009007652
        %v642 = vmul.bf16 %v626, 1009007652
        %v643 = vmax.bf16 %v611, %v627
        %v644 = vmax.bf16 %v612, %v628
        %v645 = vmax.bf16 %v613, %v629
        %v646 = vmax.bf16 %v614, %v630
        %v647 = vmax.bf16 %v615, %v631
        %v648 = vmax.bf16 %v616, %v632
        %v649 = vmax.bf16 %v617, %v633
        %v650 = vmax.bf16 %v618, %v634
        %v651 = vmax.bf16 %v619, %v635
        %v652 = vmax.bf16 %v620, %v636
        %v653 = vmax.bf16 %v621, %v637
        %v654 = vmax.bf16 %v622, %v638
        %v655 = vmax.bf16 %v623, %v639
        %v656 = vmax.bf16 %v624, %v640
        %v657 = vmax.bf16 %v625, %v641
        %v658 = vmax.bf16 %v626, %v642
        %v659 = vld [vmem:[%s3] sm:$0xff]
        %v660 = vld [vmem:[%s3 + $0x8] sm:$0xff]
        %v661 = vld [vmem:[%s3 + $0x10] sm:$0xff]
        %v662 = vld [vmem:[%s3 + $0x18] sm:$0xff]
        %v663 = vld [vmem:[%s3 + $0x20] sm:$0xff]
        %v664 = vld [vmem:[%s3 + $0x28] sm:$0xff]
        %v665 = vld [vmem:[%s3 + $0x30] sm:$0xff]
        %v666 = vld [vmem:[%s3 + $0x38] sm:$0xff]
        %v667 = vld [vmem:[%s3 + $0x40] sm:$0xff]
        %v668 = vld [vmem:[%s3 + $0x48] sm:$0xff]
        %v669 = vld [vmem:[%s3 + $0x50] sm:$0xff]
        %v670 = vld [vmem:[%s3 + $0x58] sm:$0xff]
        %v671 = vld [vmem:[%s3 + $0x60] sm:$0xff]
        %v672 = vld [vmem:[%s3 + $0x68] sm:$0xff]
        %v673 = vld [vmem:[%s3 + $0x70] sm:$0xff]
        %v674 = vld [vmem:[%s3 + $0x78] sm:$0xff]
        %v675 = vld [vmem:[%s3 + $0x80] sm:$0xff]
        %v676 = vld [vmem:[%s3 + $0x88] sm:$0xff]
        %v677 = vld [vmem:[%s3 + $0x90] sm:$0xff]
        %v678 = vld [vmem:[%s3 + $0x98] sm:$0xff]
        %v679 = vld [vmem:[%s3 + $0xa0] sm:$0xff]
        %v680 = vld [vmem:[%s3 + $0xa8] sm:$0xff]
        %v681 = vld [vmem:[%s3 + $0xb0] sm:$0xff]
        %v682 = vld [vmem:[%s3 + $0xb8] sm:$0xff]
        %v683 = vld [vmem:[%s3 + $0xc0] sm:$0xff]
        %v684 = vld [vmem:[%s3 + $0xc8] sm:$0xff]
        %v685 = vld [vmem:[%s3 + $0xd0] sm:$0xff]
        %v686 = vld [vmem:[%s3 + $0xd8] sm:$0xff]
        %v687 = vld [vmem:[%s3 + $0xe0] sm:$0xff]
        %v688 = vld [vmem:[%s3 + $0xe8] sm:$0xff]
        %v689 = vld [vmem:[%s3 + $0xf0] sm:$0xff]
        %v690 = vld [vmem:[%s3 + $0xf8] sm:$0xff]
        %v723 = vunpack.c.l.b16 %v659
        %v724 = vunpack.c.h.b16 %v659
        %v725 = vunpack.c.l.b16 %v660
        %v726 = vunpack.c.h.b16 %v660
        %v727 = vunpack.c.l.b16 %v661
        %v728 = vunpack.c.h.b16 %v661
        %v729 = vunpack.c.l.b16 %v662
        %v730 = vunpack.c.h.b16 %v662
        %v731 = vunpack.c.l.b16 %v663
        %v732 = vunpack.c.h.b16 %v663
        %v733 = vunpack.c.l.b16 %v664
        %v734 = vunpack.c.h.b16 %v664
        %v735 = vunpack.c.l.b16 %v665
        %v736 = vunpack.c.h.b16 %v665
        %v737 = vunpack.c.l.b16 %v666
        %v738 = vunpack.c.h.b16 %v666
        %v739 = vunpack.c.l.b16 %v667
        %v740 = vunpack.c.h.b16 %v667
        %v741 = vunpack.c.l.b16 %v668
        %v742 = vunpack.c.h.b16 %v668
        %v743 = vunpack.c.l.b16 %v669
        %v744 = vunpack.c.h.b16 %v669
        %v745 = vunpack.c.l.b16 %v670
        %v746 = vunpack.c.h.b16 %v670
        %v747 = vunpack.c.l.b16 %v671
        %v748 = vunpack.c.h.b16 %v671
        %v749 = vunpack.c.l.b16 %v672
        %v750 = vunpack.c.h.b16 %v672
        %v751 = vunpack.c.l.b16 %v673
        %v752 = vunpack.c.h.b16 %v673
        %v753 = vunpack.c.l.b16 %v674
        %v754 = vunpack.c.h.b16 %v674
        %v755 = vunpack.c.l.b16 %v675
        %v756 = vunpack.c.h.b16 %v675
        %v757 = vunpack.c.l.b16 %v676
        %v758 = vunpack.c.h.b16 %v676
        %v759 = vunpack.c.l.b16 %v677
        %v760 = vunpack.c.h.b16 %v677
        %v761 = vunpack.c.l.b16 %v678
        %v762 = vunpack.c.h.b16 %v678
        %v763 = vunpack.c.l.b16 %v679
        %v764 = vunpack.c.h.b16 %v679
        %v765 = vunpack.c.l.b16 %v680
        %v766 = vunpack.c.h.b16 %v680
        %v767 = vunpack.c.l.b16 %v681
        %v768 = vunpack.c.h.b16 %v681
        %v769 = vunpack.c.l.b16 %v682
        %v770 = vunpack.c.h.b16 %v682
        %v771 = vunpack.c.l.b16 %v683
        %v772 = vunpack.c.h.b16 %v683
        %v773 = vunpack.c.l.b16 %v684
        %v774 = vunpack.c.h.b16 %v684
        %v775 = vunpack.c.l.b16 %v685
        %v776 = vunpack.c.h.b16 %v685
        %v777 = vunpack.c.l.b16 %v686
        %v778 = vunpack.c.h.b16 %v686
        %v779 = vunpack.c.l.b16 %v687
        %v780 = vunpack.c.h.b16 %v687
        %v781 = vunpack.c.l.b16 %v688
        %v782 = vunpack.c.h.b16 %v688
        %v783 = vunpack.c.l.b16 %v689
        %v784 = vunpack.c.h.b16 %v689
        %v785 = vunpack.c.l.b16 %v690
        %v786 = vunpack.c.h.b16 %v690
        %v787 = vpack.c.b16 %v727, %v723
        %v788 = vpack.c.b16 %v728, %v724
        %v789 = vpack.c.b16 %v729, %v725
        %v790 = vpack.c.b16 %v730, %v726
        %v791 = vpack.c.b16 %v735, %v731
        %v792 = vpack.c.b16 %v736, %v732
        %v793 = vpack.c.b16 %v737, %v733
        %v794 = vpack.c.b16 %v738, %v734
        %v795 = vpack.c.b16 %v743, %v739
        %v796 = vpack.c.b16 %v744, %v740
        %v797 = vpack.c.b16 %v745, %v741
        %v798 = vpack.c.b16 %v746, %v742
        %v799 = vpack.c.b16 %v751, %v747
        %v800 = vpack.c.b16 %v752, %v748
        %v801 = vpack.c.b16 %v753, %v749
        %v802 = vpack.c.b16 %v754, %v750
        %v803 = vpack.c.b16 %v759, %v755
        %v804 = vpack.c.b16 %v760, %v756
        %v805 = vpack.c.b16 %v761, %v757
        %v806 = vpack.c.b16 %v762, %v758
        %v807 = vpack.c.b16 %v767, %v763
        %v808 = vpack.c.b16 %v768, %v764
        %v809 = vpack.c.b16 %v769, %v765
        %v810 = vpack.c.b16 %v770, %v766
        %v811 = vpack.c.b16 %v775, %v771
        %v812 = vpack.c.b16 %v776, %v772
        %v813 = vpack.c.b16 %v777, %v773
        %v814 = vpack.c.b16 %v778, %v774
        %v815 = vpack.c.b16 %v783, %v779
        %v816 = vpack.c.b16 %v784, %v780
        %v817 = vpack.c.b16 %v785, %v781
        %v818 = vpack.c.b16 %v786, %v782
        %851 = vmatprep.subr.bf16.mxu0 %v816
        %852 = vmatpush1.bf16.msra.mxu0 %v815
        %853 = vmatprep.subr.bf16.mxu0 %v812
        %854 = vmatpush1.bf16.msra.mxu0 %v811
        %855 = vmatprep.subr.bf16.mxu0 %v808
        %856 = vmatpush1.bf16.msra.mxu0 %v807
        %857 = vmatprep.subr.bf16.mxu0 %v804
        %858 = vmatpush1.bf16.msra.mxu0 %v803
        %859 = vmatprep.subr.bf16.mxu0 %v800
        %860 = vmatpush1.bf16.msra.mxu0 %v799
        %861 = vmatprep.subr.bf16.mxu0 %v796
        %862 = vmatpush1.bf16.msra.mxu0 %v795
        %863 = vmatprep.subr.bf16.mxu0 %v792
        %864 = vmatpush1.bf16.msra.mxu0 %v791
        %865 = vmatprep.subr.bf16.mxu0 %v788
        %866 = vmatpush1.bf16.msra.mxu0 %v787
        %867 = vmatprep.subr.bf16.mxu0 0
        %868 = vmatpush2.bf16.msra.mxu0 0
        %869 = vmatprep.subr.bf16.mxu0 0
        %870 = vmatpush2.bf16.msra.mxu0 0
        %871 = vmatprep.subr.bf16.mxu0 0
        %872 = vmatpush2.bf16.msra.mxu0 0
        %873 = vmatprep.subr.bf16.mxu0 0
        %874 = vmatpush2.bf16.msra.mxu0 0
        %875 = vmatprep.subr.bf16.mxu0 0
        %876 = vmatpush2.bf16.msra.mxu0 0
        %877 = vmatprep.subr.bf16.mxu0 0
        %878 = vmatpush2.bf16.msra.mxu0 0
        %879 = vmatprep.subr.bf16.mxu0 0
        %880 = vmatpush2.bf16.msra.mxu0 0
        %881 = vmatprep.subr.bf16.mxu0 0
        %882 = vmatpush2.bf16.msra.mxu0 0
        %883 = vmatprep.mubr.bf16.mxu0 0
        %884 = vmatmul.mubr.bf16.gmra.mxu0 %v643
        %v885 = vpop.f32.mrf.mxu0
        %v886 = vadd.f32 0.0, %v885
        %v887 = vpop.f32.mrf.mxu0
        %v888 = vadd.f32 0.0, %v887
        %v889 = vpop.f32.mrf.mxu0
        %v890 = vadd.f32 0.0, %v889
        %v891 = vpop.f32.mrf.mxu0
        %v892 = vadd.f32 0.0, %v891
        %893 = vmatprep.mubr.bf16.mxu0 0
        %894 = vmatmul.mubr.bf16.gmra.mxu0 %v644
        %v895 = vpop.f32.mrf.mxu0
        %v896 = vadd.f32 0.0, %v895
        %v897 = vpop.f32.mrf.mxu0
        %v898 = vadd.f32 0.0, %v897
        %v899 = vpop.f32.mrf.mxu0
        %v900 = vadd.f32 0.0, %v899
        %v901 = vpop.f32.mrf.mxu0
        %v902 = vadd.f32 0.0, %v901
        %903 = vmatprep.mubr.bf16.mxu0 0
        %904 = vmatmul.mubr.bf16.gmra.mxu0 %v645
        %v905 = vpop.f32.mrf.mxu0
        %v906 = vadd.f32 0.0, %v905
        %v907 = vpop.f32.mrf.mxu0
        %v908 = vadd.f32 0.0, %v907
        %v909 = vpop.f32.mrf.mxu0
        %v910 = vadd.f32 0.0, %v909
        %v911 = vpop.f32.mrf.mxu0
        %v912 = vadd.f32 0.0, %v911
        %913 = vmatprep.mubr.bf16.mxu0 0
        %914 = vmatmul.mubr.bf16.gmra.mxu0 %v646
        %v915 = vpop.f32.mrf.mxu0
        %v916 = vadd.f32 0.0, %v915
        %v917 = vpop.f32.mrf.mxu0
        %v918 = vadd.f32 0.0, %v917
        %v919 = vpop.f32.mrf.mxu0
        %v920 = vadd.f32 0.0, %v919
        %v921 = vpop.f32.mrf.mxu0
        %v922 = vadd.f32 0.0, %v921
        %923 = vmatprep.mubr.bf16.mxu0 0
        %924 = vmatmul.mubr.bf16.gmra.mxu0 %v647
        %v925 = vpop.f32.mrf.mxu0
        %v926 = vadd.f32 0.0, %v925
        %v927 = vpop.f32.mrf.mxu0
        %v928 = vadd.f32 0.0, %v927
        %v929 = vpop.f32.mrf.mxu0
        %v930 = vadd.f32 0.0, %v929
        %v931 = vpop.f32.mrf.mxu0
        %v932 = vadd.f32 0.0, %v931
        %933 = vmatprep.mubr.bf16.mxu0 0
        %934 = vmatmul.mubr.bf16.gmra.mxu0 %v648
        %v935 = vpop.f32.mrf.mxu0
        %v936 = vadd.f32 0.0, %v935
        %v937 = vpop.f32.mrf.mxu0
        %v938 = vadd.f32 0.0, %v937
        %v939 = vpop.f32.mrf.mxu0
        %v940 = vadd.f32 0.0, %v939
        %v941 = vpop.f32.mrf.mxu0
        %v942 = vadd.f32 0.0, %v941
        %943 = vmatprep.mubr.bf16.mxu0 0
        %944 = vmatmul.mubr.bf16.gmra.mxu0 %v649
        %v945 = vpop.f32.mrf.mxu0
        %v946 = vadd.f32 0.0, %v945
        %v947 = vpop.f32.mrf.mxu0
        %v948 = vadd.f32 0.0, %v947
        %v949 = vpop.f32.mrf.mxu0
        %v950 = vadd.f32 0.0, %v949
        %v951 = vpop.f32.mrf.mxu0
        %v952 = vadd.f32 0.0, %v951
        %953 = vmatprep.mubr.bf16.mxu0 0
        %954 = vmatmul.mubr.bf16.gmra.mxu0 %v650
        %v955 = vpop.f32.mrf.mxu0
        %v956 = vadd.f32 0.0, %v955
        %v957 = vpop.f32.mrf.mxu0
        %v958 = vadd.f32 0.0, %v957
        %v959 = vpop.f32.mrf.mxu0
        %v960 = vadd.f32 0.0, %v959
        %v961 = vpop.f32.mrf.mxu0
        %v962 = vadd.f32 0.0, %v961
        %963 = vmatprep.mubr.bf16.mxu0 0
        %964 = vmatmul.mubr.bf16.gmra.mxu0 %v651
        %v965 = vpop.f32.mrf.mxu0
        %v966 = vadd.f32 0.0, %v965
        %v967 = vpop.f32.mrf.mxu0
        %v968 = vadd.f32 0.0, %v967
        %v969 = vpop.f32.mrf.mxu0
        %v970 = vadd.f32 0.0, %v969
        %v971 = vpop.f32.mrf.mxu0
        %v972 = vadd.f32 0.0, %v971
        %973 = vmatprep.mubr.bf16.mxu0 0
        %974 = vmatmul.mubr.bf16.gmra.mxu0 %v652
        %v975 = vpop.f32.mrf.mxu0
        %v976 = vadd.f32 0.0, %v975
        %v977 = vpop.f32.mrf.mxu0
        %v978 = vadd.f32 0.0, %v977
        %v979 = vpop.f32.mrf.mxu0
        %v980 = vadd.f32 0.0, %v979
        %v981 = vpop.f32.mrf.mxu0
        %v982 = vadd.f32 0.0, %v981
        %983 = vmatprep.mubr.bf16.mxu0 0
        %984 = vmatmul.mubr.bf16.gmra.mxu0 %v653
        %v985 = vpop.f32.mrf.mxu0
        %v986 = vadd.f32 0.0, %v985
        %v987 = vpop.f32.mrf.mxu0
        %v988 = vadd.f32 0.0, %v987
        %v989 = vpop.f32.mrf.mxu0
        %v990 = vadd.f32 0.0, %v989
        %v991 = vpop.f32.mrf.mxu0
        %v992 = vadd.f32 0.0, %v991
        %993 = vmatprep.mubr.bf16.mxu0 0
        %994 = vmatmul.mubr.bf16.gmra.mxu0 %v654
        %v995 = vpop.f32.mrf.mxu0
        %v996 = vadd.f32 0.0, %v995
        %v997 = vpop.f32.mrf.mxu0
        %v998 = vadd.f32 0.0, %v997
        %v999 = vpop.f32.mrf.mxu0
        %v1000 = vadd.f32 0.0, %v999
        %v1001 = vpop.f32.mrf.mxu0
        %v1002 = vadd.f32 0.0, %v1001
        %1003 = vmatprep.mubr.bf16.mxu0 0
        %1004 = vmatmul.mubr.bf16.gmra.mxu0 %v655
        %v1005 = vpop.f32.mrf.mxu0
        %v1006 = vadd.f32 0.0, %v1005
        %v1007 = vpop.f32.mrf.mxu0
        %v1008 = vadd.f32 0.0, %v1007
        %v1009 = vpop.f32.mrf.mxu0
        %v1010 = vadd.f32 0.0, %v1009
        %v1011 = vpop.f32.mrf.mxu0
        %v1012 = vadd.f32 0.0, %v1011
        %1013 = vmatprep.mubr.bf16.mxu0 0
        %1014 = vmatmul.mubr.bf16.gmra.mxu0 %v656
        %v1015 = vpop.f32.mrf.mxu0
        %v1016 = vadd.f32 0.0, %v1015
        %v1017 = vpop.f32.mrf.mxu0
        %v1018 = vadd.f32 0.0, %v1017
        %v1019 = vpop.f32.mrf.mxu0
        %v1020 = vadd.f32 0.0, %v1019
        %v1021 = vpop.f32.mrf.mxu0
        %v1022 = vadd.f32 0.0, %v1021
        %1023 = vmatprep.mubr.bf16.mxu0 0
        %1024 = vmatmul.mubr.bf16.gmra.mxu0 %v657
        %v1025 = vpop.f32.mrf.mxu0
        %v1026 = vadd.f32 0.0, %v1025
        %v1027 = vpop.f32.mrf.mxu0
        %v1028 = vadd.f32 0.0, %v1027
        %v1029 = vpop.f32.mrf.mxu0
        %v1030 = vadd.f32 0.0, %v1029
        %v1031 = vpop.f32.mrf.mxu0
        %v1032 = vadd.f32 0.0, %v1031
        %1033 = vmatprep.mubr.bf16.mxu0 0
        %1034 = vmatmul.mubr.bf16.gmra.mxu0 %v658
        %v1035 = vpop.f32.mrf.mxu0
        %v1036 = vadd.f32 0.0, %v1035
        %v1037 = vpop.f32.mrf.mxu0
        %v1038 = vadd.f32 0.0, %v1037
        %v1039 = vpop.f32.mrf.mxu0
        %v1040 = vadd.f32 0.0, %v1039
        %v1041 = vpop.f32.mrf.mxu0
        %v1042 = vadd.f32 0.0, %v1041
        %1043 = vdwg.mxu0
        %1044 = vmatprep.subr.bf16.mxu0 %v818
        %1045 = vmatpush1.bf16.msra.mxu0 %v817
        %1046 = vmatprep.subr.bf16.mxu0 %v814
        %1047 = vmatpush1.bf16.msra.mxu0 %v813
        %1048 = vmatprep.subr.bf16.mxu0 %v810
        %1049 = vmatpush1.bf16.msra.mxu0 %v809
        %1050 = vmatprep.subr.bf16.mxu0 %v806
        %1051 = vmatpush1.bf16.msra.mxu0 %v805
        %1052 = vmatprep.subr.bf16.mxu0 %v802
        %1053 = vmatpush1.bf16.msra.mxu0 %v801
        %1054 = vmatprep.subr.bf16.mxu0 %v798
        %1055 = vmatpush1.bf16.msra.mxu0 %v797
        %1056 = vmatprep.subr.bf16.mxu0 %v794
        %1057 = vmatpush1.bf16.msra.mxu0 %v793
        %1058 = vmatprep.subr.bf16.mxu0 %v790
        %1059 = vmatpush1.bf16.msra.mxu0 %v789
        %1060 = vmatprep.subr.bf16.mxu0 0
        %1061 = vmatpush2.bf16.msra.mxu0 0
        %1062 = vmatprep.subr.bf16.mxu0 0
        %1063 = vmatpush2.bf16.msra.mxu0 0
        %1064 = vmatprep.subr.bf16.mxu0 0
        %1065 = vmatpush2.bf16.msra.mxu0 0
        %1066 = vmatprep.subr.bf16.mxu0 0
        %1067 = vmatpush2.bf16.msra.mxu0 0
        %1068 = vmatprep.subr.bf16.mxu0 0
        %1069 = vmatpush2.bf16.msra.mxu0 0
        %1070 = vmatprep.subr.bf16.mxu0 0
        %1071 = vmatpush2.bf16.msra.mxu0 0
        %1072 = vmatprep.subr.bf16.mxu0 0
        %1073 = vmatpush2.bf16.msra.mxu0 0
        %1074 = vmatprep.subr.bf16.mxu0 0
        %1075 = vmatpush2.bf16.msra.mxu0 0
        %1076 = vmatprep.mubr.bf16.mxu0 0
        %1077 = vmatmul.mubr.bf16.gmra.mxu0 %v643
        %v1078 = vpop.f32.mrf.mxu0
        %v1079 = vadd.f32 0.0, %v1078
        %v1080 = vpop.f32.mrf.mxu0
        %v1081 = vadd.f32 0.0, %v1080
        %v1082 = vpop.f32.mrf.mxu0
        %v1083 = vadd.f32 0.0, %v1082
        %v1084 = vpop.f32.mrf.mxu0
        %v1085 = vadd.f32 0.0, %v1084
        %1086 = vmatprep.mubr.bf16.mxu0 0
        %1087 = vmatmul.mubr.bf16.gmra.mxu0 %v644
        %v1088 = vpop.f32.mrf.mxu0
        %v1089 = vadd.f32 0.0, %v1088
        %v1090 = vpop.f32.mrf.mxu0
        %v1091 = vadd.f32 0.0, %v1090
        %v1092 = vpop.f32.mrf.mxu0
        %v1093 = vadd.f32 0.0, %v1092
        %v1094 = vpop.f32.mrf.mxu0
        %v1095 = vadd.f32 0.0, %v1094
        %1096 = vmatprep.mubr.bf16.mxu0 0
        %1097 = vmatmul.mubr.bf16.gmra.mxu0 %v645
        %v1098 = vpop.f32.mrf.mxu0
        %v1099 = vadd.f32 0.0, %v1098
        %v1100 = vpop.f32.mrf.mxu0
        %v1101 = vadd.f32 0.0, %v1100
        %v1102 = vpop.f32.mrf.mxu0
        %v1103 = vadd.f32 0.0, %v1102
        %v1104 = vpop.f32.mrf.mxu0
        %v1105 = vadd.f32 0.0, %v1104
        %1106 = vmatprep.mubr.bf16.mxu0 0
        %1107 = vmatmul.mubr.bf16.gmra.mxu0 %v646
        %v1108 = vpop.f32.mrf.mxu0
        %v1109 = vadd.f32 0.0, %v1108
        %v1110 = vpop.f32.mrf.mxu0
        %v1111 = vadd.f32 0.0, %v1110
        %v1112 = vpop.f32.mrf.mxu0
        %v1113 = vadd.f32 0.0, %v1112
        %v1114 = vpop.f32.mrf.mxu0
        %v1115 = vadd.f32 0.0, %v1114
        %1116 = vmatprep.mubr.bf16.mxu0 0
        %1117 = vmatmul.mubr.bf16.gmra.mxu0 %v647
        %v1118 = vpop.f32.mrf.mxu0
        %v1119 = vadd.f32 0.0, %v1118
        %v1120 = vpop.f32.mrf.mxu0
        %v1121 = vadd.f32 0.0, %v1120
        %v1122 = vpop.f32.mrf.mxu0
        %v1123 = vadd.f32 0.0, %v1122
        %v1124 = vpop.f32.mrf.mxu0
        %v1125 = vadd.f32 0.0, %v1124
        %1126 = vmatprep.mubr.bf16.mxu0 0
        %1127 = vmatmul.mubr.bf16.gmra.mxu0 %v648
        %v1128 = vpop.f32.mrf.mxu0
        %v1129 = vadd.f32 0.0, %v1128
        %v1130 = vpop.f32.mrf.mxu0
        %v1131 = vadd.f32 0.0, %v1130
        %v1132 = vpop.f32.mrf.mxu0
        %v1133 = vadd.f32 0.0, %v1132
        %v1134 = vpop.f32.mrf.mxu0
        %v1135 = vadd.f32 0.0, %v1134
        %1136 = vmatprep.mubr.bf16.mxu0 0
        %1137 = vmatmul.mubr.bf16.gmra.mxu0 %v649
        %v1138 = vpop.f32.mrf.mxu0
        %v1139 = vadd.f32 0.0, %v1138
        %v1140 = vpop.f32.mrf.mxu0
        %v1141 = vadd.f32 0.0, %v1140
        %v1142 = vpop.f32.mrf.mxu0
        %v1143 = vadd.f32 0.0, %v1142
        %v1144 = vpop.f32.mrf.mxu0
        %v1145 = vadd.f32 0.0, %v1144
        %1146 = vmatprep.mubr.bf16.mxu0 0
        %1147 = vmatmul.mubr.bf16.gmra.mxu0 %v650
        %v1148 = vpop.f32.mrf.mxu0
        %v1149 = vadd.f32 0.0, %v1148
        %v1150 = vpop.f32.mrf.mxu0
        %v1151 = vadd.f32 0.0, %v1150
        %v1152 = vpop.f32.mrf.mxu0
        %v1153 = vadd.f32 0.0, %v1152
        %v1154 = vpop.f32.mrf.mxu0
        %v1155 = vadd.f32 0.0, %v1154
        %1156 = vmatprep.mubr.bf16.mxu0 0
        %1157 = vmatmul.mubr.bf16.gmra.mxu0 %v651
        %v1158 = vpop.f32.mrf.mxu0
        %v1159 = vadd.f32 0.0, %v1158
        %v1160 = vpop.f32.mrf.mxu0
        %v1161 = vadd.f32 0.0, %v1160
        %v1162 = vpop.f32.mrf.mxu0
        %v1163 = vadd.f32 0.0, %v1162
        %v1164 = vpop.f32.mrf.mxu0
        %v1165 = vadd.f32 0.0, %v1164
        %1166 = vmatprep.mubr.bf16.mxu0 0
        %1167 = vmatmul.mubr.bf16.gmra.mxu0 %v652
        %v1168 = vpop.f32.mrf.mxu0
        %v1169 = vadd.f32 0.0, %v1168
        %v1170 = vpop.f32.mrf.mxu0
        %v1171 = vadd.f32 0.0, %v1170
        %v1172 = vpop.f32.mrf.mxu0
        %v1173 = vadd.f32 0.0, %v1172
        %v1174 = vpop.f32.mrf.mxu0
        %v1175 = vadd.f32 0.0, %v1174
        %1176 = vmatprep.mubr.bf16.mxu0 0
        %1177 = vmatmul.mubr.bf16.gmra.mxu0 %v653
        %v1178 = vpop.f32.mrf.mxu0
        %v1179 = vadd.f32 0.0, %v1178
        %v1180 = vpop.f32.mrf.mxu0
        %v1181 = vadd.f32 0.0, %v1180
        %v1182 = vpop.f32.mrf.mxu0
        %v1183 = vadd.f32 0.0, %v1182
        %v1184 = vpop.f32.mrf.mxu0
        %v1185 = vadd.f32 0.0, %v1184
        %1186 = vmatprep.mubr.bf16.mxu0 0
        %1187 = vmatmul.mubr.bf16.gmra.mxu0 %v654
        %v1188 = vpop.f32.mrf.mxu0
        %v1189 = vadd.f32 0.0, %v1188
        %v1190 = vpop.f32.mrf.mxu0
        %v1191 = vadd.f32 0.0, %v1190
        %v1192 = vpop.f32.mrf.mxu0
        %v1193 = vadd.f32 0.0, %v1192
        %v1194 = vpop.f32.mrf.mxu0
        %v1195 = vadd.f32 0.0, %v1194
        %1196 = vmatprep.mubr.bf16.mxu0 0
        %1197 = vmatmul.mubr.bf16.gmra.mxu0 %v655
        %v1198 = vpop.f32.mrf.mxu0
        %v1199 = vadd.f32 0.0, %v1198
        %v1200 = vpop.f32.mrf.mxu0
        %v1201 = vadd.f32 0.0, %v1200
        %v1202 = vpop.f32.mrf.mxu0
        %v1203 = vadd.f32 0.0, %v1202
        %v1204 = vpop.f32.mrf.mxu0
        %v1205 = vadd.f32 0.0, %v1204
        %1206 = vmatprep.mubr.bf16.mxu0 0
        %1207 = vmatmul.mubr.bf16.gmra.mxu0 %v656
        %v1208 = vpop.f32.mrf.mxu0
        %v1209 = vadd.f32 0.0, %v1208
        %v1210 = vpop.f32.mrf.mxu0
        %v1211 = vadd.f32 0.0, %v1210
        %v1212 = vpop.f32.mrf.mxu0
        %v1213 = vadd.f32 0.0, %v1212
        %v1214 = vpop.f32.mrf.mxu0
        %v1215 = vadd.f32 0.0, %v1214
        %1216 = vmatprep.mubr.bf16.mxu0 0
        %1217 = vmatmul.mubr.bf16.gmra.mxu0 %v657
        %v1218 = vpop.f32.mrf.mxu0
        %v1219 = vadd.f32 0.0, %v1218
        %v1220 = vpop.f32.mrf.mxu0
        %v1221 = vadd.f32 0.0, %v1220
        %v1222 = vpop.f32.mrf.mxu0
        %v1223 = vadd.f32 0.0, %v1222
        %v1224 = vpop.f32.mrf.mxu0
        %v1225 = vadd.f32 0.0, %v1224
        %1226 = vmatprep.mubr.bf16.mxu0 0
        %1227 = vmatmul.mubr.bf16.gmra.mxu0 %v658
        %v1228 = vpop.f32.mrf.mxu0
        %v1229 = vadd.f32 0.0, %v1228
        %v1230 = vpop.f32.mrf.mxu0
        %v1231 = vadd.f32 0.0, %v1230
        %v1232 = vpop.f32.mrf.mxu0
        %v1233 = vadd.f32 0.0, %v1232
        %v1234 = vpop.f32.mrf.mxu0
        %v1235 = vadd.f32 0.0, %v1234
        %1236 = vdwg.mxu0
        %v1237 = vpack.c.bf16 %v890, %v886
        %v1238 = vpack.c.bf16 %v892, %v888
        %v1239 = vpack.c.bf16 %v1083, %v1079
        %v1240 = vpack.c.bf16 %v1085, %v1081
        %v1241 = vpack.c.bf16 %v900, %v896
        %v1242 = vpack.c.bf16 %v902, %v898
        %v1243 = vpack.c.bf16 %v1093, %v1089
        %v1244 = vpack.c.bf16 %v1095, %v1091
        %v1245 = vpack.c.bf16 %v910, %v906
        %v1246 = vpack.c.bf16 %v912, %v908
        %v1247 = vpack.c.bf16 %v1103, %v1099
        %v1248 = vpack.c.bf16 %v1105, %v1101
        %v1249 = vpack.c.bf16 %v920, %v916
        %v1250 = vpack.c.bf16 %v922, %v918
        %v1251 = vpack.c.bf16 %v1113, %v1109
        %v1252 = vpack.c.bf16 %v1115, %v1111
        %v1253 = vpack.c.bf16 %v930, %v926
        %v1254 = vpack.c.bf16 %v932, %v928
        %v1255 = vpack.c.bf16 %v1123, %v1119
        %v1256 = vpack.c.bf16 %v1125, %v1121
        %v1257 = vpack.c.bf16 %v940, %v936
        %v1258 = vpack.c.bf16 %v942, %v938
        %v1259 = vpack.c.bf16 %v1133, %v1129
        %v1260 = vpack.c.bf16 %v1135, %v1131
        %v1261 = vpack.c.bf16 %v950, %v946
        %v1262 = vpack.c.bf16 %v952, %v948
        %v1263 = vpack.c.bf16 %v1143, %v1139
        %v1264 = vpack.c.bf16 %v1145, %v1141
        %v1265 = vpack.c.bf16 %v960, %v956
        %v1266 = vpack.c.bf16 %v962, %v958
        %v1267 = vpack.c.bf16 %v1153, %v1149
        %v1268 = vpack.c.bf16 %v1155, %v1151
        %v1269 = vpack.c.bf16 %v970, %v966
        %v1270 = vpack.c.bf16 %v972, %v968
        %v1271 = vpack.c.bf16 %v1163, %v1159
        %v1272 = vpack.c.bf16 %v1165, %v1161
        %v1273 = vpack.c.bf16 %v980, %v976
        %v1274 = vpack.c.bf16 %v982, %v978
        %v1275 = vpack.c.bf16 %v1173, %v1169
        %v1276 = vpack.c.bf16 %v1175, %v1171
        %v1277 = vpack.c.bf16 %v990, %v986
        %v1278 = vpack.c.bf16 %v992, %v988
        %v1279 = vpack.c.bf16 %v1183, %v1179
        %v1280 = vpack.c.bf16 %v1185, %v1181
        %v1281 = vpack.c.bf16 %v1000, %v996
        %v1282 = vpack.c.bf16 %v1002, %v998
        %v1283 = vpack.c.bf16 %v1193, %v1189
        %v1284 = vpack.c.bf16 %v1195, %v1191
        %v1285 = vpack.c.bf16 %v1010, %v1006
        %v1286 = vpack.c.bf16 %v1012, %v1008
        %v1287 = vpack.c.bf16 %v1203, %v1199
        %v1288 = vpack.c.bf16 %v1205, %v1201
        %v1289 = vpack.c.bf16 %v1020, %v1016
        %v1290 = vpack.c.bf16 %v1022, %v1018
        %v1291 = vpack.c.bf16 %v1213, %v1209
        %v1292 = vpack.c.bf16 %v1215, %v1211
        %v1293 = vpack.c.bf16 %v1030, %v1026
        %v1294 = vpack.c.bf16 %v1032, %v1028
        %v1295 = vpack.c.bf16 %v1223, %v1219
        %v1296 = vpack.c.bf16 %v1225, %v1221
        %v1297 = vpack.c.bf16 %v1040, %v1036
        %v1298 = vpack.c.bf16 %v1042, %v1038
        %v1299 = vpack.c.bf16 %v1233, %v1229
        %v1300 = vpack.c.bf16 %v1235, %v1231
        %v1301 = vld [vmem:[%s4] sm:$0xf]
        %v1304 = vunpack.c.l.s4 1966171168
        %v1305 = vunpack.c.0.s8 %v1304
        %v1306 = vlaneseq
        %v1307 = vshrl.u32 %v1306, 7
        %v1308 = vsub.s32 %v1305, %v1307
        %v1309 = vrot.slane %v1301, %v1308
        %v1310 = vcombine.high %v1309, %v1309
        %v1312 = vunpack.c.l.s4 1966171168
        %v1313 = vunpack.c.0.s8 %v1312
        %v1314 = vlaneseq
        %v1315 = vshrl.u32 %v1314, 7
        %v1316 = vsub.s32 %v1313, %v1315
        %v1317 = vrot.slane %v1309, %v1316
        %v1319 = vunpack.c.l.s4 1966171168
        %v1320 = vunpack.c.0.s8 %v1319
        %v1321 = vlaneseq
        %v1322 = vshrl.u32 %v1321, 7
        %v1323 = vsub.s32 %v1320, %v1322
        %v1324 = vrot.slane %v1310, %v1323
        %v1325 = vcombine.high %v1317, %v1317
        %v1326 = vcombine.high %v1324, %v1324
        %v1328 = vpack.i.b16 %v1317, %v1317
        %v1330 = vlaneseq
        %v1331 = vshrl.u32 %v1330, 7
        %v1332 = vsub.s32 0, %v1331
        %v1333 = vrot.slane %v1328, %v1332
        %v1335 = vpack.i.b16 %v1324, %v1324
        %v1337 = vlaneseq
        %v1338 = vshrl.u32 %v1337, 7
        %v1339 = vsub.s32 0, %v1338
        %v1340 = vrot.slane %v1335, %v1339
        %v1342 = vpack.i.b16 %v1325, %v1325
        %v1344 = vlaneseq
        %v1345 = vshrl.u32 %v1344, 7
        %v1346 = vsub.s32 0, %v1345
        %v1347 = vrot.slane %v1342, %v1346
        %v1349 = vpack.i.b16 %v1326, %v1326
        %v1351 = vlaneseq
        %v1352 = vshrl.u32 %v1351, 7
        %v1353 = vsub.s32 0, %v1352
        %v1354 = vrot.slane %v1349, %v1353
        %v1355 = vadd.bf16 %v1237, %v1333
        %v1356 = vadd.bf16 %v1238, %v1340
        %v1357 = vadd.bf16 %v1239, %v1347
        %v1358 = vadd.bf16 %v1240, %v1354
        %v1359 = vadd.bf16 %v1241, %v1333
        %v1360 = vadd.bf16 %v1242, %v1340
        %v1361 = vadd.bf16 %v1243, %v1347
        %v1362 = vadd.bf16 %v1244, %v1354
        %v1363 = vadd.bf16 %v1245, %v1333
        %v1364 = vadd.bf16 %v1246, %v1340
        %v1365 = vadd.bf16 %v1247, %v1347
        %v1366 = vadd.bf16 %v1248, %v1354
        %v1367 = vadd.bf16 %v1249, %v1333
        %v1368 = vadd.bf16 %v1250, %v1340
        %v1369 = vadd.bf16 %v1251, %v1347
        %v1370 = vadd.bf16 %v1252, %v1354
        %v1371 = vadd.bf16 %v1253, %v1333
        %v1372 = vadd.bf16 %v1254, %v1340
        %v1373 = vadd.bf16 %v1255, %v1347
        %v1374 = vadd.bf16 %v1256, %v1354
        %v1375 = vadd.bf16 %v1257, %v1333
        %v1376 = vadd.bf16 %v1258, %v1340
        %v1377 = vadd.bf16 %v1259, %v1347
        %v1378 = vadd.bf16 %v1260, %v1354
        %v1379 = vadd.bf16 %v1261, %v1333
        %v1380 = vadd.bf16 %v1262, %v1340
        %v1381 = vadd.bf16 %v1263, %v1347
        %v1382 = vadd.bf16 %v1264, %v1354
        %v1383 = vadd.bf16 %v1265, %v1333
        %v1384 = vadd.bf16 %v1266, %v1340
        %v1385 = vadd.bf16 %v1267, %v1347
        %v1386 = vadd.bf16 %v1268, %v1354
        %v1387 = vadd.bf16 %v1269, %v1333
        %v1388 = vadd.bf16 %v1270, %v1340
        %v1389 = vadd.bf16 %v1271, %v1347
        %v1390 = vadd.bf16 %v1272, %v1354
        %v1391 = vadd.bf16 %v1273, %v1333
        %v1392 = vadd.bf16 %v1274, %v1340
        %v1393 = vadd.bf16 %v1275, %v1347
        %v1394 = vadd.bf16 %v1276, %v1354
        %v1395 = vadd.bf16 %v1277, %v1333
        %v1396 = vadd.bf16 %v1278, %v1340
        %v1397 = vadd.bf16 %v1279, %v1347
        %v1398 = vadd.bf16 %v1280, %v1354
        %v1399 = vadd.bf16 %v1281, %v1333
        %v1400 = vadd.bf16 %v1282, %v1340
        %v1401 = vadd.bf16 %v1283, %v1347
        %v1402 = vadd.bf16 %v1284, %v1354
        %v1403 = vadd.bf16 %v1285, %v1333
        %v1404 = vadd.bf16 %v1286, %v1340
        %v1405 = vadd.bf16 %v1287, %v1347
        %v1406 = vadd.bf16 %v1288, %v1354
        %v1407 = vadd.bf16 %v1289, %v1333
        %v1408 = vadd.bf16 %v1290, %v1340
        %v1409 = vadd.bf16 %v1291, %v1347
        %v1410 = vadd.bf16 %v1292, %v1354
        %v1411 = vadd.bf16 %v1293, %v1333
        %v1412 = vadd.bf16 %v1294, %v1340
        %v1413 = vadd.bf16 %v1295, %v1347
        %v1414 = vadd.bf16 %v1296, %v1354
        %v1415 = vadd.bf16 %v1297, %v1333
        %v1416 = vadd.bf16 %v1298, %v1340
        %v1417 = vadd.bf16 %v1299, %v1347
        %v1418 = vadd.bf16 %v1300, %v1354
        %v1419 = vmul.bf16 %v1355, 1009007652
        %v1420 = vmul.bf16 %v1356, 1009007652
        %v1421 = vmul.bf16 %v1357, 1009007652
        %v1422 = vmul.bf16 %v1358, 1009007652
        %v1423 = vmul.bf16 %v1359, 1009007652
        %v1424 = vmul.bf16 %v1360, 1009007652
        %v1425 = vmul.bf16 %v1361, 1009007652
        %v1426 = vmul.bf16 %v1362, 1009007652
        %v1427 = vmul.bf16 %v1363, 1009007652
        %v1428 = vmul.bf16 %v1364, 1009007652
        %v1429 = vmul.bf16 %v1365, 1009007652
        %v1430 = vmul.bf16 %v1366, 1009007652
        %v1431 = vmul.bf16 %v1367, 1009007652
        %v1432 = vmul.bf16 %v1368, 1009007652
        %v1433 = vmul.bf16 %v1369, 1009007652
        %v1434 = vmul.bf16 %v1370, 1009007652
        %v1435 = vmul.bf16 %v1371, 1009007652
        %v1436 = vmul.bf16 %v1372, 1009007652
        %v1437 = vmul.bf16 %v1373, 1009007652
        %v1438 = vmul.bf16 %v1374, 1009007652
        %v1439 = vmul.bf16 %v1375, 1009007652
        %v1440 = vmul.bf16 %v1376, 1009007652
        %v1441 = vmul.bf16 %v1377, 1009007652
        %v1442 = vmul.bf16 %v1378, 1009007652
        %v1443 = vmul.bf16 %v1379, 1009007652
        %v1444 = vmul.bf16 %v1380, 1009007652
        %v1445 = vmul.bf16 %v1381, 1009007652
        %v1446 = vmul.bf16 %v1382, 1009007652
        %v1447 = vmul.bf16 %v1383, 1009007652
        %v1448 = vmul.bf16 %v1384, 1009007652
        %v1449 = vmul.bf16 %v1385, 1009007652
        %v1450 = vmul.bf16 %v1386, 1009007652
        %v1451 = vmul.bf16 %v1387, 1009007652
        %v1452 = vmul.bf16 %v1388, 1009007652
        %v1453 = vmul.bf16 %v1389, 1009007652
        %v1454 = vmul.bf16 %v1390, 1009007652
        %v1455 = vmul.bf16 %v1391, 1009007652
        %v1456 = vmul.bf16 %v1392, 1009007652
        %v1457 = vmul.bf16 %v1393, 1009007652
        %v1458 = vmul.bf16 %v1394, 1009007652
        %v1459 = vmul.bf16 %v1395, 1009007652
        %v1460 = vmul.bf16 %v1396, 1009007652
        %v1461 = vmul.bf16 %v1397, 1009007652
        %v1462 = vmul.bf16 %v1398, 1009007652
        %v1463 = vmul.bf16 %v1399, 1009007652
        %v1464 = vmul.bf16 %v1400, 1009007652
        %v1465 = vmul.bf16 %v1401, 1009007652
        %v1466 = vmul.bf16 %v1402, 1009007652
        %v1467 = vmul.bf16 %v1403, 1009007652
        %v1468 = vmul.bf16 %v1404, 1009007652
        %v1469 = vmul.bf16 %v1405, 1009007652
        %v1470 = vmul.bf16 %v1406, 1009007652
        %v1471 = vmul.bf16 %v1407, 1009007652
        %v1472 = vmul.bf16 %v1408, 1009007652
        %v1473 = vmul.bf16 %v1409, 1009007652
        %v1474 = vmul.bf16 %v1410, 1009007652
        %v1475 = vmul.bf16 %v1411, 1009007652
        %v1476 = vmul.bf16 %v1412, 1009007652
        %v1477 = vmul.bf16 %v1413, 1009007652
        %v1478 = vmul.bf16 %v1414, 1009007652
        %v1479 = vmul.bf16 %v1415, 1009007652
        %v1480 = vmul.bf16 %v1416, 1009007652
        %v1481 = vmul.bf16 %v1417, 1009007652
        %v1482 = vmul.bf16 %v1418, 1009007652
        %v1483 = vmax.bf16 %v1355, %v1419
        %v1484 = vmax.bf16 %v1356, %v1420
        %v1485 = vmax.bf16 %v1357, %v1421
        %v1486 = vmax.bf16 %v1358, %v1422
        %v1487 = vmax.bf16 %v1359, %v1423
        %v1488 = vmax.bf16 %v1360, %v1424
        %v1489 = vmax.bf16 %v1361, %v1425
        %v1490 = vmax.bf16 %v1362, %v1426
        %v1491 = vmax.bf16 %v1363, %v1427
        %v1492 = vmax.bf16 %v1364, %v1428
        %v1493 = vmax.bf16 %v1365, %v1429
        %v1494 = vmax.bf16 %v1366, %v1430
        %v1495 = vmax.bf16 %v1367, %v1431
        %v1496 = vmax.bf16 %v1368, %v1432
        %v1497 = vmax.bf16 %v1369, %v1433
        %v1498 = vmax.bf16 %v1370, %v1434
        %v1499 = vmax.bf16 %v1371, %v1435
        %v1500 = vmax.bf16 %v1372, %v1436
        %v1501 = vmax.bf16 %v1373, %v1437
        %v1502 = vmax.bf16 %v1374, %v1438
        %v1503 = vmax.bf16 %v1375, %v1439
        %v1504 = vmax.bf16 %v1376, %v1440
        %v1505 = vmax.bf16 %v1377, %v1441
        %v1506 = vmax.bf16 %v1378, %v1442
        %v1507 = vmax.bf16 %v1379, %v1443
        %v1508 = vmax.bf16 %v1380, %v1444
        %v1509 = vmax.bf16 %v1381, %v1445
        %v1510 = vmax.bf16 %v1382, %v1446
        %v1511 = vmax.bf16 %v1383, %v1447
        %v1512 = vmax.bf16 %v1384, %v1448
        %v1513 = vmax.bf16 %v1385, %v1449
        %v1514 = vmax.bf16 %v1386, %v1450
        %v1515 = vmax.bf16 %v1387, %v1451
        %v1516 = vmax.bf16 %v1388, %v1452
        %v1517 = vmax.bf16 %v1389, %v1453
        %v1518 = vmax.bf16 %v1390, %v1454
        %v1519 = vmax.bf16 %v1391, %v1455
        %v1520 = vmax.bf16 %v1392, %v1456
        %v1521 = vmax.bf16 %v1393, %v1457
        %v1522 = vmax.bf16 %v1394, %v1458
        %v1523 = vmax.bf16 %v1395, %v1459
        %v1524 = vmax.bf16 %v1396, %v1460
        %v1525 = vmax.bf16 %v1397, %v1461
        %v1526 = vmax.bf16 %v1398, %v1462
        %v1527 = vmax.bf16 %v1399, %v1463
        %v1528 = vmax.bf16 %v1400, %v1464
        %v1529 = vmax.bf16 %v1401, %v1465
        %v1530 = vmax.bf16 %v1402, %v1466
        %v1531 = vmax.bf16 %v1403, %v1467
        %v1532 = vmax.bf16 %v1404, %v1468
        %v1533 = vmax.bf16 %v1405, %v1469
        %v1534 = vmax.bf16 %v1406, %v1470
        %v1535 = vmax.bf16 %v1407, %v1471
        %v1536 = vmax.bf16 %v1408, %v1472
        %v1537 = vmax.bf16 %v1409, %v1473
        %v1538 = vmax.bf16 %v1410, %v1474
        %v1539 = vmax.bf16 %v1411, %v1475
        %v1540 = vmax.bf16 %v1412, %v1476
        %v1541 = vmax.bf16 %v1413, %v1477
        %v1542 = vmax.bf16 %v1414, %v1478
        %v1543 = vmax.bf16 %v1415, %v1479
        %v1544 = vmax.bf16 %v1416, %v1480
        %v1545 = vmax.bf16 %v1417, %v1481
        %v1546 = vmax.bf16 %v1418, %v1482
        %v1547 = vld [vmem:[%s5] sm:$0xff]
        %v1548 = vld [vmem:[%s5 + $0x8] sm:$0xff]
        %v1549 = vld [vmem:[%s5 + $0x10] sm:$0xff]
        %v1550 = vld [vmem:[%s5 + $0x18] sm:$0xff]
        %v1551 = vld [vmem:[%s5 + $0x20] sm:$0xff]
        %v1552 = vld [vmem:[%s5 + $0x28] sm:$0xff]
        %v1553 = vld [vmem:[%s5 + $0x30] sm:$0xff]
        %v1554 = vld [vmem:[%s5 + $0x38] sm:$0xff]
        %v1555 = vld [vmem:[%s5 + $0x40] sm:$0xff]
        %v1556 = vld [vmem:[%s5 + $0x48] sm:$0xff]
        %v1557 = vld [vmem:[%s5 + $0x50] sm:$0xff]
        %v1558 = vld [vmem:[%s5 + $0x58] sm:$0xff]
        %v1559 = vld [vmem:[%s5 + $0x60] sm:$0xff]
        %v1560 = vld [vmem:[%s5 + $0x68] sm:$0xff]
        %v1561 = vld [vmem:[%s5 + $0x70] sm:$0xff]
        %v1562 = vld [vmem:[%s5 + $0x78] sm:$0xff]
        %v1563 = vld [vmem:[%s5 + $0x80] sm:$0xff]
        %v1564 = vld [vmem:[%s5 + $0x88] sm:$0xff]
        %v1565 = vld [vmem:[%s5 + $0x90] sm:$0xff]
        %v1566 = vld [vmem:[%s5 + $0x98] sm:$0xff]
        %v1567 = vld [vmem:[%s5 + $0xa0] sm:$0xff]
        %v1568 = vld [vmem:[%s5 + $0xa8] sm:$0xff]
        %v1569 = vld [vmem:[%s5 + $0xb0] sm:$0xff]
        %v1570 = vld [vmem:[%s5 + $0xb8] sm:$0xff]
        %v1571 = vld [vmem:[%s5 + $0xc0] sm:$0xff]
        %v1572 = vld [vmem:[%s5 + $0xc8] sm:$0xff]
        %v1573 = vld [vmem:[%s5 + $0xd0] sm:$0xff]
        %v1574 = vld [vmem:[%s5 + $0xd8] sm:$0xff]
        %v1575 = vld [vmem:[%s5 + $0xe0] sm:$0xff]
        %v1576 = vld [vmem:[%s5 + $0xe8] sm:$0xff]
        %v1577 = vld [vmem:[%s5 + $0xf0] sm:$0xff]
        %v1578 = vld [vmem:[%s5 + $0xf8] sm:$0xff]
        %v1579 = vld [vmem:[%s5 + $0x100] sm:$0xff]
        %v1580 = vld [vmem:[%s5 + $0x108] sm:$0xff]
        %v1581 = vld [vmem:[%s5 + $0x110] sm:$0xff]
        %v1582 = vld [vmem:[%s5 + $0x118] sm:$0xff]
        %v1583 = vld [vmem:[%s5 + $0x120] sm:$0xff]
        %v1584 = vld [vmem:[%s5 + $0x128] sm:$0xff]
        %v1585 = vld [vmem:[%s5 + $0x130] sm:$0xff]
        %v1586 = vld [vmem:[%s5 + $0x138] sm:$0xff]
        %v1587 = vld [vmem:[%s5 + $0x140] sm:$0xff]
        %v1588 = vld [vmem:[%s5 + $0x148] sm:$0xff]
        %v1589 = vld [vmem:[%s5 + $0x150] sm:$0xff]
        %v1590 = vld [vmem:[%s5 + $0x158] sm:$0xff]
        %v1591 = vld [vmem:[%s5 + $0x160] sm:$0xff]
        %v1592 = vld [vmem:[%s5 + $0x168] sm:$0xff]
        %v1593 = vld [vmem:[%s5 + $0x170] sm:$0xff]
        %v1594 = vld [vmem:[%s5 + $0x178] sm:$0xff]
        %v1595 = vld [vmem:[%s5 + $0x180] sm:$0xff]
        %v1596 = vld [vmem:[%s5 + $0x188] sm:$0xff]
        %v1597 = vld [vmem:[%s5 + $0x190] sm:$0xff]
        %v1598 = vld [vmem:[%s5 + $0x198] sm:$0xff]
        %v1599 = vld [vmem:[%s5 + $0x1a0] sm:$0xff]
        %v1600 = vld [vmem:[%s5 + $0x1a8] sm:$0xff]
        %v1601 = vld [vmem:[%s5 + $0x1b0] sm:$0xff]
        %v1602 = vld [vmem:[%s5 + $0x1b8] sm:$0xff]
        %v1603 = vld [vmem:[%s5 + $0x1c0] sm:$0xff]
        %v1604 = vld [vmem:[%s5 + $0x1c8] sm:$0xff]
        %v1605 = vld [vmem:[%s5 + $0x1d0] sm:$0xff]
        %v1606 = vld [vmem:[%s5 + $0x1d8] sm:$0xff]
        %v1607 = vld [vmem:[%s5 + $0x1e0] sm:$0xff]
        %v1608 = vld [vmem:[%s5 + $0x1e8] sm:$0xff]
        %v1609 = vld [vmem:[%s5 + $0x1f0] sm:$0xff]
        %v1610 = vld [vmem:[%s5 + $0x1f8] sm:$0xff]
        %v1611 = vld [vmem:[%s6] sm:$0x3]
        %v1613 = vlaneseq
        %v1614 = vshrl.u32 %v1613, 7
        %v1615 = vsub.s32 0, %v1614
        %v1616 = vrot.slane %v1611, %v1615
        %v1617 = vlaneseq
        %v1618 = vshrl.u32 %v1617, 7
        %v1619 = vsub.s32 1, %v1618
        %v1620 = vrot.slane %v1611, %v1619
        %v1687 = vunpack.c.l.b16 %v1547
        %v1688 = vunpack.c.h.b16 %v1547
        %v1689 = vunpack.c.l.b16 %v1548
        %v1690 = vunpack.c.h.b16 %v1548
        %v1691 = vunpack.c.l.b16 %v1549
        %v1692 = vunpack.c.h.b16 %v1549
        %v1693 = vunpack.c.l.b16 %v1550
        %v1694 = vunpack.c.h.b16 %v1550
        %v1695 = vunpack.c.l.b16 %v1551
        %v1696 = vunpack.c.h.b16 %v1551
        %v1697 = vunpack.c.l.b16 %v1552
        %v1698 = vunpack.c.h.b16 %v1552
        %v1699 = vunpack.c.l.b16 %v1553
        %v1700 = vunpack.c.h.b16 %v1553
        %v1701 = vunpack.c.l.b16 %v1554
        %v1702 = vunpack.c.h.b16 %v1554
        %v1703 = vunpack.c.l.b16 %v1555
        %v1704 = vunpack.c.h.b16 %v1555
        %v1705 = vunpack.c.l.b16 %v1556
        %v1706 = vunpack.c.h.b16 %v1556
        %v1707 = vunpack.c.l.b16 %v1557
        %v1708 = vunpack.c.h.b16 %v1557
        %v1709 = vunpack.c.l.b16 %v1558
        %v1710 = vunpack.c.h.b16 %v1558
        %v1711 = vunpack.c.l.b16 %v1559
        %v1712 = vunpack.c.h.b16 %v1559
        %v1713 = vunpack.c.l.b16 %v1560
        %v1714 = vunpack.c.h.b16 %v1560
        %v1715 = vunpack.c.l.b16 %v1561
        %v1716 = vunpack.c.h.b16 %v1561
        %v1717 = vunpack.c.l.b16 %v1562
        %v1718 = vunpack.c.h.b16 %v1562
        %v1719 = vunpack.c.l.b16 %v1563
        %v1720 = vunpack.c.h.b16 %v1563
        %v1721 = vunpack.c.l.b16 %v1564
        %v1722 = vunpack.c.h.b16 %v1564
        %v1723 = vunpack.c.l.b16 %v1565
        %v1724 = vunpack.c.h.b16 %v1565
        %v1725 = vunpack.c.l.b16 %v1566
        %v1726 = vunpack.c.h.b16 %v1566
        %v1727 = vunpack.c.l.b16 %v1567
        %v1728 = vunpack.c.h.b16 %v1567
        %v1729 = vunpack.c.l.b16 %v1568
        %v1730 = vunpack.c.h.b16 %v1568
        %v1731 = vunpack.c.l.b16 %v1569
        %v1732 = vunpack.c.h.b16 %v1569
        %v1733 = vunpack.c.l.b16 %v1570
        %v1734 = vunpack.c.h.b16 %v1570
        %v1735 = vunpack.c.l.b16 %v1571
        %v1736 = vunpack.c.h.b16 %v1571
        %v1737 = vunpack.c.l.b16 %v1572
        %v1738 = vunpack.c.h.b16 %v1572
        %v1739 = vunpack.c.l.b16 %v1573
        %v1740 = vunpack.c.h.b16 %v1573
        %v1741 = vunpack.c.l.b16 %v1574
        %v1742 = vunpack.c.h.b16 %v1574
        %v1743 = vunpack.c.l.b16 %v1575
        %v1744 = vunpack.c.h.b16 %v1575
        %v1745 = vunpack.c.l.b16 %v1576
        %v1746 = vunpack.c.h.b16 %v1576
        %v1747 = vunpack.c.l.b16 %v1577
        %v1748 = vunpack.c.h.b16 %v1577
        %v1749 = vunpack.c.l.b16 %v1578
        %v1750 = vunpack.c.h.b16 %v1578
        %v1751 = vunpack.c.l.b16 %v1579
        %v1752 = vunpack.c.h.b16 %v1579
        %v1753 = vunpack.c.l.b16 %v1580
        %v1754 = vunpack.c.h.b16 %v1580
        %v1755 = vunpack.c.l.b16 %v1581
        %v1756 = vunpack.c.h.b16 %v1581
        %v1757 = vunpack.c.l.b16 %v1582
        %v1758 = vunpack.c.h.b16 %v1582
        %v1759 = vunpack.c.l.b16 %v1583
        %v1760 = vunpack.c.h.b16 %v1583
        %v1761 = vunpack.c.l.b16 %v1584
        %v1762 = vunpack.c.h.b16 %v1584
        %v1763 = vunpack.c.l.b16 %v1585
        %v1764 = vunpack.c.h.b16 %v1585
        %v1765 = vunpack.c.l.b16 %v1586
        %v1766 = vunpack.c.h.b16 %v1586
        %v1767 = vunpack.c.l.b16 %v1587
        %v1768 = vunpack.c.h.b16 %v1587
        %v1769 = vunpack.c.l.b16 %v1588
        %v1770 = vunpack.c.h.b16 %v1588
        %v1771 = vunpack.c.l.b16 %v1589
        %v1772 = vunpack.c.h.b16 %v1589
        %v1773 = vunpack.c.l.b16 %v1590
        %v1774 = vunpack.c.h.b16 %v1590
        %v1775 = vunpack.c.l.b16 %v1591
        %v1776 = vunpack.c.h.b16 %v1591
        %v1777 = vunpack.c.l.b16 %v1592
        %v1778 = vunpack.c.h.b16 %v1592
        %v1779 = vunpack.c.l.b16 %v1593
        %v1780 = vunpack.c.h.b16 %v1593
        %v1781 = vunpack.c.l.b16 %v1594
        %v1782 = vunpack.c.h.b16 %v1594
        %v1783 = vunpack.c.l.b16 %v1595
        %v1784 = vunpack.c.h.b16 %v1595
        %v1785 = vunpack.c.l.b16 %v1596
        %v1786 = vunpack.c.h.b16 %v1596
        %v1787 = vunpack.c.l.b16 %v1597
        %v1788 = vunpack.c.h.b16 %v1597
        %v1789 = vunpack.c.l.b16 %v1598
        %v1790 = vunpack.c.h.b16 %v1598
        %v1791 = vunpack.c.l.b16 %v1599
        %v1792 = vunpack.c.h.b16 %v1599
        %v1793 = vunpack.c.l.b16 %v1600
        %v1794 = vunpack.c.h.b16 %v1600
        %v1795 = vunpack.c.l.b16 %v1601
        %v1796 = vunpack.c.h.b16 %v1601
        %v1797 = vunpack.c.l.b16 %v1602
        %v1798 = vunpack.c.h.b16 %v1602
        %v1799 = vunpack.c.l.b16 %v1603
        %v1800 = vunpack.c.h.b16 %v1603
        %v1801 = vunpack.c.l.b16 %v1604
        %v1802 = vunpack.c.h.b16 %v1604
        %v1803 = vunpack.c.l.b16 %v1605
        %v1804 = vunpack.c.h.b16 %v1605
        %v1805 = vunpack.c.l.b16 %v1606
        %v1806 = vunpack.c.h.b16 %v1606
        %v1807 = vunpack.c.l.b16 %v1607
        %v1808 = vunpack.c.h.b16 %v1607
        %v1809 = vunpack.c.l.b16 %v1608
        %v1810 = vunpack.c.h.b16 %v1608
        %v1811 = vunpack.c.l.b16 %v1609
        %v1812 = vunpack.c.h.b16 %v1609
        %v1813 = vunpack.c.l.b16 %v1610
        %v1814 = vunpack.c.h.b16 %v1610
        %v1815 = vpack.c.b16 %v1689, %v1687
        %v1816 = vpack.c.b16 %v1690, %v1688
        %v1817 = vpack.c.b16 %v1693, %v1691
        %v1818 = vpack.c.b16 %v1694, %v1692
        %v1819 = vpack.c.b16 %v1697, %v1695
        %v1820 = vpack.c.b16 %v1698, %v1696
        %v1821 = vpack.c.b16 %v1701, %v1699
        %v1822 = vpack.c.b16 %v1702, %v1700
        %v1823 = vpack.c.b16 %v1705, %v1703
        %v1824 = vpack.c.b16 %v1706, %v1704
        %v1825 = vpack.c.b16 %v1709, %v1707
        %v1826 = vpack.c.b16 %v1710, %v1708
        %v1827 = vpack.c.b16 %v1713, %v1711
        %v1828 = vpack.c.b16 %v1714, %v1712
        %v1829 = vpack.c.b16 %v1717, %v1715
        %v1830 = vpack.c.b16 %v1718, %v1716
        %v1831 = vpack.c.b16 %v1721, %v1719
        %v1832 = vpack.c.b16 %v1722, %v1720
        %v1833 = vpack.c.b16 %v1725, %v1723
        %v1834 = vpack.c.b16 %v1726, %v1724
        %v1835 = vpack.c.b16 %v1729, %v1727
        %v1836 = vpack.c.b16 %v1730, %v1728
        %v1837 = vpack.c.b16 %v1733, %v1731
        %v1838 = vpack.c.b16 %v1734, %v1732
        %v1839 = vpack.c.b16 %v1737, %v1735
        %v1840 = vpack.c.b16 %v1738, %v1736
        %v1841 = vpack.c.b16 %v1741, %v1739
        %v1842 = vpack.c.b16 %v1742, %v1740
        %v1843 = vpack.c.b16 %v1745, %v1743
        %v1844 = vpack.c.b16 %v1746, %v1744
        %v1845 = vpack.c.b16 %v1749, %v1747
        %v1846 = vpack.c.b16 %v1750, %v1748
        %v1847 = vpack.c.b16 %v1753, %v1751
        %v1848 = vpack.c.b16 %v1754, %v1752
        %v1849 = vpack.c.b16 %v1757, %v1755
        %v1850 = vpack.c.b16 %v1758, %v1756
        %v1851 = vpack.c.b16 %v1761, %v1759
        %v1852 = vpack.c.b16 %v1762, %v1760
        %v1853 = vpack.c.b16 %v1765, %v1763
        %v1854 = vpack.c.b16 %v1766, %v1764
        %v1855 = vpack.c.b16 %v1769, %v1767
        %v1856 = vpack.c.b16 %v1770, %v1768
        %v1857 = vpack.c.b16 %v1773, %v1771
        %v1858 = vpack.c.b16 %v1774, %v1772
        %v1859 = vpack.c.b16 %v1777, %v1775
        %v1860 = vpack.c.b16 %v1778, %v1776
        %v1861 = vpack.c.b16 %v1781, %v1779
        %v1862 = vpack.c.b16 %v1782, %v1780
        %v1863 = vpack.c.b16 %v1785, %v1783
        %v1864 = vpack.c.b16 %v1786, %v1784
        %v1865 = vpack.c.b16 %v1789, %v1787
        %v1866 = vpack.c.b16 %v1790, %v1788
        %v1867 = vpack.c.b16 %v1793, %v1791
        %v1868 = vpack.c.b16 %v1794, %v1792
        %v1869 = vpack.c.b16 %v1797, %v1795
        %v1870 = vpack.c.b16 %v1798, %v1796
        %v1871 = vpack.c.b16 %v1801, %v1799
        %v1872 = vpack.c.b16 %v1802, %v1800
        %v1873 = vpack.c.b16 %v1805, %v1803
        %v1874 = vpack.c.b16 %v1806, %v1804
        %v1875 = vpack.c.b16 %v1809, %v1807
        %v1876 = vpack.c.b16 %v1810, %v1808
        %v1877 = vpack.c.b16 %v1813, %v1811
        %v1878 = vpack.c.b16 %v1814, %v1812
        %1943 = vmatprep.subr.bf16.mxu0 %v1830
        %1944 = vmatpush1.bf16.msra.mxu0 %v1829
        %1945 = vmatprep.subr.bf16.mxu0 %v1828
        %1946 = vmatpush1.bf16.msra.mxu0 %v1827
        %1947 = vmatprep.subr.bf16.mxu0 %v1826
        %1948 = vmatpush1.bf16.msra.mxu0 %v1825
        %1949 = vmatprep.subr.bf16.mxu0 %v1824
        %1950 = vmatpush1.bf16.msra.mxu0 %v1823
        %1951 = vmatprep.subr.bf16.mxu0 %v1822
        %1952 = vmatpush1.bf16.msra.mxu0 %v1821
        %1953 = vmatprep.subr.bf16.mxu0 %v1820
        %1954 = vmatpush1.bf16.msra.mxu0 %v1819
        %1955 = vmatprep.subr.bf16.mxu0 %v1818
        %1956 = vmatpush1.bf16.msra.mxu0 %v1817
        %1957 = vmatprep.subr.bf16.mxu0 %v1816
        %1958 = vmatpush1.bf16.msra.mxu0 %v1815
        %1959 = vmatprep.subr.bf16.mxu0 %v1846
        %1960 = vmatpush2.bf16.msra.mxu0 %v1845
        %1961 = vmatprep.subr.bf16.mxu0 %v1844
        %1962 = vmatpush2.bf16.msra.mxu0 %v1843
        %1963 = vmatprep.subr.bf16.mxu0 %v1842
        %1964 = vmatpush2.bf16.msra.mxu0 %v1841
        %1965 = vmatprep.subr.bf16.mxu0 %v1840
        %1966 = vmatpush2.bf16.msra.mxu0 %v1839
        %1967 = vmatprep.subr.bf16.mxu0 %v1838
        %1968 = vmatpush2.bf16.msra.mxu0 %v1837
        %1969 = vmatprep.subr.bf16.mxu0 %v1836
        %1970 = vmatpush2.bf16.msra.mxu0 %v1835
        %1971 = vmatprep.subr.bf16.mxu0 %v1834
        %1972 = vmatpush2.bf16.msra.mxu0 %v1833
        %1973 = vmatprep.subr.bf16.mxu0 %v1832
        %1974 = vmatpush2.bf16.msra.mxu0 %v1831
        %1975 = vmatprep.mubr.bf16.mxu0 %v1484
        %1976 = vmatmul.mubr.bf16.gmra.mxu0 %v1483
        %v1977 = vpop.f32.mrf.mxu0
        %v1978 = vadd.f32 %v1616, %v1977
        %v1979 = vpop.f32.mrf.mxu0
        %v1980 = vadd.f32 %v1620, %v1979
        %v1981 = vpop.f32.mrf.mxu0
        %v1982 = vadd.f32 %v1616, %v1981
        %v1983 = vpop.f32.mrf.mxu0
        %v1984 = vadd.f32 %v1620, %v1983
        %1985 = vmatprep.mubr.bf16.mxu0 %v1488
        %1986 = vmatmul.mubr.bf16.gmra.mxu0 %v1487
        %v1987 = vpop.f32.mrf.mxu0
        %v1988 = vadd.f32 %v1616, %v1987
        %v1989 = vpop.f32.mrf.mxu0
        %v1990 = vadd.f32 %v1620, %v1989
        %v1991 = vpop.f32.mrf.mxu0
        %v1992 = vadd.f32 %v1616, %v1991
        %v1993 = vpop.f32.mrf.mxu0
        %v1994 = vadd.f32 %v1620, %v1993
        %1995 = vmatprep.mubr.bf16.mxu0 %v1492
        %1996 = vmatmul.mubr.bf16.gmra.mxu0 %v1491
        %v1997 = vpop.f32.mrf.mxu0
        %v1998 = vadd.f32 %v1616, %v1997
        %v1999 = vpop.f32.mrf.mxu0
        %v2000 = vadd.f32 %v1620, %v1999
        %v2001 = vpop.f32.mrf.mxu0
        %v2002 = vadd.f32 %v1616, %v2001
        %v2003 = vpop.f32.mrf.mxu0
        %v2004 = vadd.f32 %v1620, %v2003
        %2005 = vmatprep.mubr.bf16.mxu0 %v1496
        %2006 = vmatmul.mubr.bf16.gmra.mxu0 %v1495
        %v2007 = vpop.f32.mrf.mxu0
        %v2008 = vadd.f32 %v1616, %v2007
        %v2009 = vpop.f32.mrf.mxu0
        %v2010 = vadd.f32 %v1620, %v2009
        %v2011 = vpop.f32.mrf.mxu0
        %v2012 = vadd.f32 %v1616, %v2011
        %v2013 = vpop.f32.mrf.mxu0
        %v2014 = vadd.f32 %v1620, %v2013
        %2015 = vmatprep.mubr.bf16.mxu0 %v1500
        %2016 = vmatmul.mubr.bf16.gmra.mxu0 %v1499
        %v2017 = vpop.f32.mrf.mxu0
        %v2018 = vadd.f32 %v1616, %v2017
        %v2019 = vpop.f32.mrf.mxu0
        %v2020 = vadd.f32 %v1620, %v2019
        %v2021 = vpop.f32.mrf.mxu0
        %v2022 = vadd.f32 %v1616, %v2021
        %v2023 = vpop.f32.mrf.mxu0
        %v2024 = vadd.f32 %v1620, %v2023
        %2025 = vmatprep.mubr.bf16.mxu0 %v1504
        %2026 = vmatmul.mubr.bf16.gmra.mxu0 %v1503
        %v2027 = vpop.f32.mrf.mxu0
        %v2028 = vadd.f32 %v1616, %v2027
        %v2029 = vpop.f32.mrf.mxu0
        %v2030 = vadd.f32 %v1620, %v2029
        %v2031 = vpop.f32.mrf.mxu0
        %v2032 = vadd.f32 %v1616, %v2031
        %v2033 = vpop.f32.mrf.mxu0
        %v2034 = vadd.f32 %v1620, %v2033
        %2035 = vmatprep.mubr.bf16.mxu0 %v1508
        %2036 = vmatmul.mubr.bf16.gmra.mxu0 %v1507
        %v2037 = vpop.f32.mrf.mxu0
        %v2038 = vadd.f32 %v1616, %v2037
        %v2039 = vpop.f32.mrf.mxu0
        %v2040 = vadd.f32 %v1620, %v2039
        %v2041 = vpop.f32.mrf.mxu0
        %v2042 = vadd.f32 %v1616, %v2041
        %v2043 = vpop.f32.mrf.mxu0
        %v2044 = vadd.f32 %v1620, %v2043
        %2045 = vmatprep.mubr.bf16.mxu0 %v1512
        %2046 = vmatmul.mubr.bf16.gmra.mxu0 %v1511
        %v2047 = vpop.f32.mrf.mxu0
        %v2048 = vadd.f32 %v1616, %v2047
        %v2049 = vpop.f32.mrf.mxu0
        %v2050 = vadd.f32 %v1620, %v2049
        %v2051 = vpop.f32.mrf.mxu0
        %v2052 = vadd.f32 %v1616, %v2051
        %v2053 = vpop.f32.mrf.mxu0
        %v2054 = vadd.f32 %v1620, %v2053
        %2055 = vmatprep.mubr.bf16.mxu0 %v1516
        %2056 = vmatmul.mubr.bf16.gmra.mxu0 %v1515
        %v2057 = vpop.f32.mrf.mxu0
        %v2058 = vadd.f32 %v1616, %v2057
        %v2059 = vpop.f32.mrf.mxu0
        %v2060 = vadd.f32 %v1620, %v2059
        %v2061 = vpop.f32.mrf.mxu0
        %v2062 = vadd.f32 %v1616, %v2061
        %v2063 = vpop.f32.mrf.mxu0
        %v2064 = vadd.f32 %v1620, %v2063
        %2065 = vmatprep.mubr.bf16.mxu0 %v1520
        %2066 = vmatmul.mubr.bf16.gmra.mxu0 %v1519
        %v2067 = vpop.f32.mrf.mxu0
        %v2068 = vadd.f32 %v1616, %v2067
        %v2069 = vpop.f32.mrf.mxu0
        %v2070 = vadd.f32 %v1620, %v2069
        %v2071 = vpop.f32.mrf.mxu0
        %v2072 = vadd.f32 %v1616, %v2071
        %v2073 = vpop.f32.mrf.mxu0
        %v2074 = vadd.f32 %v1620, %v2073
        %2075 = vmatprep.mubr.bf16.mxu0 %v1524
        %2076 = vmatmul.mubr.bf16.gmra.mxu0 %v1523
        %v2077 = vpop.f32.mrf.mxu0
        %v2078 = vadd.f32 %v1616, %v2077
        %v2079 = vpop.f32.mrf.mxu0
        %v2080 = vadd.f32 %v1620, %v2079
        %v2081 = vpop.f32.mrf.mxu0
        %v2082 = vadd.f32 %v1616, %v2081
        %v2083 = vpop.f32.mrf.mxu0
        %v2084 = vadd.f32 %v1620, %v2083
        %2085 = vmatprep.mubr.bf16.mxu0 %v1528
        %2086 = vmatmul.mubr.bf16.gmra.mxu0 %v1527
        %v2087 = vpop.f32.mrf.mxu0
        %v2088 = vadd.f32 %v1616, %v2087
        %v2089 = vpop.f32.mrf.mxu0
        %v2090 = vadd.f32 %v1620, %v2089
        %v2091 = vpop.f32.mrf.mxu0
        %v2092 = vadd.f32 %v1616, %v2091
        %v2093 = vpop.f32.mrf.mxu0
        %v2094 = vadd.f32 %v1620, %v2093
        %2095 = vmatprep.mubr.bf16.mxu0 %v1532
        %2096 = vmatmul.mubr.bf16.gmra.mxu0 %v1531
        %v2097 = vpop.f32.mrf.mxu0
        %v2098 = vadd.f32 %v1616, %v2097
        %v2099 = vpop.f32.mrf.mxu0
        %v2100 = vadd.f32 %v1620, %v2099
        %v2101 = vpop.f32.mrf.mxu0
        %v2102 = vadd.f32 %v1616, %v2101
        %v2103 = vpop.f32.mrf.mxu0
        %v2104 = vadd.f32 %v1620, %v2103
        %2105 = vmatprep.mubr.bf16.mxu0 %v1536
        %2106 = vmatmul.mubr.bf16.gmra.mxu0 %v1535
        %v2107 = vpop.f32.mrf.mxu0
        %v2108 = vadd.f32 %v1616, %v2107
        %v2109 = vpop.f32.mrf.mxu0
        %v2110 = vadd.f32 %v1620, %v2109
        %v2111 = vpop.f32.mrf.mxu0
        %v2112 = vadd.f32 %v1616, %v2111
        %v2113 = vpop.f32.mrf.mxu0
        %v2114 = vadd.f32 %v1620, %v2113
        %2115 = vmatprep.mubr.bf16.mxu0 %v1540
        %2116 = vmatmul.mubr.bf16.gmra.mxu0 %v1539
        %v2117 = vpop.f32.mrf.mxu0
        %v2118 = vadd.f32 %v1616, %v2117
        %v2119 = vpop.f32.mrf.mxu0
        %v2120 = vadd.f32 %v1620, %v2119
        %v2121 = vpop.f32.mrf.mxu0
        %v2122 = vadd.f32 %v1616, %v2121
        %v2123 = vpop.f32.mrf.mxu0
        %v2124 = vadd.f32 %v1620, %v2123
        %2125 = vmatprep.mubr.bf16.mxu0 %v1544
        %2126 = vmatmul.mubr.bf16.gmra.mxu0 %v1543
        %v2127 = vpop.f32.mrf.mxu0
        %v2128 = vadd.f32 %v1616, %v2127
        %v2129 = vpop.f32.mrf.mxu0
        %v2130 = vadd.f32 %v1620, %v2129
        %v2131 = vpop.f32.mrf.mxu0
        %v2132 = vadd.f32 %v1616, %v2131
        %v2133 = vpop.f32.mrf.mxu0
        %v2134 = vadd.f32 %v1620, %v2133
        %2135 = vdwg.mxu0
        %2136 = vmatprep.subr.bf16.mxu0 %v1862
        %2137 = vmatpush1.bf16.msra.mxu0 %v1861
        %2138 = vmatprep.subr.bf16.mxu0 %v1860
        %2139 = vmatpush1.bf16.msra.mxu0 %v1859
        %2140 = vmatprep.subr.bf16.mxu0 %v1858
        %2141 = vmatpush1.bf16.msra.mxu0 %v1857
        %2142 = vmatprep.subr.bf16.mxu0 %v1856
        %2143 = vmatpush1.bf16.msra.mxu0 %v1855
        %2144 = vmatprep.subr.bf16.mxu0 %v1854
        %2145 = vmatpush1.bf16.msra.mxu0 %v1853
        %2146 = vmatprep.subr.bf16.mxu0 %v1852
        %2147 = vmatpush1.bf16.msra.mxu0 %v1851
        %2148 = vmatprep.subr.bf16.mxu0 %v1850
        %2149 = vmatpush1.bf16.msra.mxu0 %v1849
        %2150 = vmatprep.subr.bf16.mxu0 %v1848
        %2151 = vmatpush1.bf16.msra.mxu0 %v1847
        %2152 = vmatprep.subr.bf16.mxu0 %v1878
        %2153 = vmatpush2.bf16.msra.mxu0 %v1877
        %2154 = vmatprep.subr.bf16.mxu0 %v1876
        %2155 = vmatpush2.bf16.msra.mxu0 %v1875
        %2156 = vmatprep.subr.bf16.mxu0 %v1874
        %2157 = vmatpush2.bf16.msra.mxu0 %v1873
        %2158 = vmatprep.subr.bf16.mxu0 %v1872
        %2159 = vmatpush2.bf16.msra.mxu0 %v1871
        %2160 = vmatprep.subr.bf16.mxu0 %v1870
        %2161 = vmatpush2.bf16.msra.mxu0 %v1869
        %2162 = vmatprep.subr.bf16.mxu0 %v1868
        %2163 = vmatpush2.bf16.msra.mxu0 %v1867
        %2164 = vmatprep.subr.bf16.mxu0 %v1866
        %2165 = vmatpush2.bf16.msra.mxu0 %v1865
        %2166 = vmatprep.subr.bf16.mxu0 %v1864
        %2167 = vmatpush2.bf16.msra.mxu0 %v1863
        %2168 = vmatprep.mubr.bf16.mxu0 %v1486
        %2169 = vmatmul.mubr.bf16.gmra.mxu0 %v1485
        %v2170 = vpop.f32.mrf.mxu0
        %v2171 = vadd.f32 %v1978, %v2170
        %v2172 = vpop.f32.mrf.mxu0
        %v2173 = vadd.f32 %v1980, %v2172
        %v2174 = vpop.f32.mrf.mxu0
        %v2175 = vadd.f32 %v1982, %v2174
        %v2176 = vpop.f32.mrf.mxu0
        %v2177 = vadd.f32 %v1984, %v2176
        %2178 = vmatprep.mubr.bf16.mxu0 %v1490
        %2179 = vmatmul.mubr.bf16.gmra.mxu0 %v1489
        %v2180 = vpop.f32.mrf.mxu0
        %v2181 = vadd.f32 %v1988, %v2180
        %v2182 = vpop.f32.mrf.mxu0
        %v2183 = vadd.f32 %v1990, %v2182
        %v2184 = vpop.f32.mrf.mxu0
        %v2185 = vadd.f32 %v1992, %v2184
        %v2186 = vpop.f32.mrf.mxu0
        %v2187 = vadd.f32 %v1994, %v2186
        %2188 = vmatprep.mubr.bf16.mxu0 %v1494
        %2189 = vmatmul.mubr.bf16.gmra.mxu0 %v1493
        %v2190 = vpop.f32.mrf.mxu0
        %v2191 = vadd.f32 %v1998, %v2190
        %v2192 = vpop.f32.mrf.mxu0
        %v2193 = vadd.f32 %v2000, %v2192
        %v2194 = vpop.f32.mrf.mxu0
        %v2195 = vadd.f32 %v2002, %v2194
        %v2196 = vpop.f32.mrf.mxu0
        %v2197 = vadd.f32 %v2004, %v2196
        %2198 = vmatprep.mubr.bf16.mxu0 %v1498
        %2199 = vmatmul.mubr.bf16.gmra.mxu0 %v1497
        %v2200 = vpop.f32.mrf.mxu0
        %v2201 = vadd.f32 %v2008, %v2200
        %v2202 = vpop.f32.mrf.mxu0
        %v2203 = vadd.f32 %v2010, %v2202
        %v2204 = vpop.f32.mrf.mxu0
        %v2205 = vadd.f32 %v2012, %v2204
        %v2206 = vpop.f32.mrf.mxu0
        %v2207 = vadd.f32 %v2014, %v2206
        %2208 = vmatprep.mubr.bf16.mxu0 %v1502
        %2209 = vmatmul.mubr.bf16.gmra.mxu0 %v1501
        %v2210 = vpop.f32.mrf.mxu0
        %v2211 = vadd.f32 %v2018, %v2210
        %v2212 = vpop.f32.mrf.mxu0
        %v2213 = vadd.f32 %v2020, %v2212
        %v2214 = vpop.f32.mrf.mxu0
        %v2215 = vadd.f32 %v2022, %v2214
        %v2216 = vpop.f32.mrf.mxu0
        %v2217 = vadd.f32 %v2024, %v2216
        %2218 = vmatprep.mubr.bf16.mxu0 %v1506
        %2219 = vmatmul.mubr.bf16.gmra.mxu0 %v1505
        %v2220 = vpop.f32.mrf.mxu0
        %v2221 = vadd.f32 %v2028, %v2220
        %v2222 = vpop.f32.mrf.mxu0
        %v2223 = vadd.f32 %v2030, %v2222
        %v2224 = vpop.f32.mrf.mxu0
        %v2225 = vadd.f32 %v2032, %v2224
        %v2226 = vpop.f32.mrf.mxu0
        %v2227 = vadd.f32 %v2034, %v2226
        %2228 = vmatprep.mubr.bf16.mxu0 %v1510
        %2229 = vmatmul.mubr.bf16.gmra.mxu0 %v1509
        %v2230 = vpop.f32.mrf.mxu0
        %v2231 = vadd.f32 %v2038, %v2230
        %v2232 = vpop.f32.mrf.mxu0
        %v2233 = vadd.f32 %v2040, %v2232
        %v2234 = vpop.f32.mrf.mxu0
        %v2235 = vadd.f32 %v2042, %v2234
        %v2236 = vpop.f32.mrf.mxu0
        %v2237 = vadd.f32 %v2044, %v2236
        %2238 = vmatprep.mubr.bf16.mxu0 %v1514
        %2239 = vmatmul.mubr.bf16.gmra.mxu0 %v1513
        %v2240 = vpop.f32.mrf.mxu0
        %v2241 = vadd.f32 %v2048, %v2240
        %v2242 = vpop.f32.mrf.mxu0
        %v2243 = vadd.f32 %v2050, %v2242
        %v2244 = vpop.f32.mrf.mxu0
        %v2245 = vadd.f32 %v2052, %v2244
        %v2246 = vpop.f32.mrf.mxu0
        %v2247 = vadd.f32 %v2054, %v2246
        %2248 = vmatprep.mubr.bf16.mxu0 %v1518
        %2249 = vmatmul.mubr.bf16.gmra.mxu0 %v1517
        %v2250 = vpop.f32.mrf.mxu0
        %v2251 = vadd.f32 %v2058, %v2250
        %v2252 = vpop.f32.mrf.mxu0
        %v2253 = vadd.f32 %v2060, %v2252
        %v2254 = vpop.f32.mrf.mxu0
        %v2255 = vadd.f32 %v2062, %v2254
        %v2256 = vpop.f32.mrf.mxu0
        %v2257 = vadd.f32 %v2064, %v2256
        %2258 = vmatprep.mubr.bf16.mxu0 %v1522
        %2259 = vmatmul.mubr.bf16.gmra.mxu0 %v1521
        %v2260 = vpop.f32.mrf.mxu0
        %v2261 = vadd.f32 %v2068, %v2260
        %v2262 = vpop.f32.mrf.mxu0
        %v2263 = vadd.f32 %v2070, %v2262
        %v2264 = vpop.f32.mrf.mxu0
        %v2265 = vadd.f32 %v2072, %v2264
        %v2266 = vpop.f32.mrf.mxu0
        %v2267 = vadd.f32 %v2074, %v2266
        %2268 = vmatprep.mubr.bf16.mxu0 %v1526
        %2269 = vmatmul.mubr.bf16.gmra.mxu0 %v1525
        %v2270 = vpop.f32.mrf.mxu0
        %v2271 = vadd.f32 %v2078, %v2270
        %v2272 = vpop.f32.mrf.mxu0
        %v2273 = vadd.f32 %v2080, %v2272
        %v2274 = vpop.f32.mrf.mxu0
        %v2275 = vadd.f32 %v2082, %v2274
        %v2276 = vpop.f32.mrf.mxu0
        %v2277 = vadd.f32 %v2084, %v2276
        %2278 = vmatprep.mubr.bf16.mxu0 %v1530
        %2279 = vmatmul.mubr.bf16.gmra.mxu0 %v1529
        %v2280 = vpop.f32.mrf.mxu0
        %v2281 = vadd.f32 %v2088, %v2280
        %v2282 = vpop.f32.mrf.mxu0
        %v2283 = vadd.f32 %v2090, %v2282
        %v2284 = vpop.f32.mrf.mxu0
        %v2285 = vadd.f32 %v2092, %v2284
        %v2286 = vpop.f32.mrf.mxu0
        %v2287 = vadd.f32 %v2094, %v2286
        %2288 = vmatprep.mubr.bf16.mxu0 %v1534
        %2289 = vmatmul.mubr.bf16.gmra.mxu0 %v1533
        %v2290 = vpop.f32.mrf.mxu0
        %v2291 = vadd.f32 %v2098, %v2290
        %v2292 = vpop.f32.mrf.mxu0
        %v2293 = vadd.f32 %v2100, %v2292
        %v2294 = vpop.f32.mrf.mxu0
        %v2295 = vadd.f32 %v2102, %v2294
        %v2296 = vpop.f32.mrf.mxu0
        %v2297 = vadd.f32 %v2104, %v2296
        %2298 = vmatprep.mubr.bf16.mxu0 %v1538
        %2299 = vmatmul.mubr.bf16.gmra.mxu0 %v1537
        %v2300 = vpop.f32.mrf.mxu0
        %v2301 = vadd.f32 %v2108, %v2300
        %v2302 = vpop.f32.mrf.mxu0
        %v2303 = vadd.f32 %v2110, %v2302
        %v2304 = vpop.f32.mrf.mxu0
        %v2305 = vadd.f32 %v2112, %v2304
        %v2306 = vpop.f32.mrf.mxu0
        %v2307 = vadd.f32 %v2114, %v2306
        %2308 = vmatprep.mubr.bf16.mxu0 %v1542
        %2309 = vmatmul.mubr.bf16.gmra.mxu0 %v1541
        %v2310 = vpop.f32.mrf.mxu0
        %v2311 = vadd.f32 %v2118, %v2310
        %v2312 = vpop.f32.mrf.mxu0
        %v2313 = vadd.f32 %v2120, %v2312
        %v2314 = vpop.f32.mrf.mxu0
        %v2315 = vadd.f32 %v2122, %v2314
        %v2316 = vpop.f32.mrf.mxu0
        %v2317 = vadd.f32 %v2124, %v2316
        %2318 = vmatprep.mubr.bf16.mxu0 %v1546
        %2319 = vmatmul.mubr.bf16.gmra.mxu0 %v1545
        %v2320 = vpop.f32.mrf.mxu0
        %v2321 = vadd.f32 %v2128, %v2320
        %v2322 = vpop.f32.mrf.mxu0
        %v2323 = vadd.f32 %v2130, %v2322
        %v2324 = vpop.f32.mrf.mxu0
        %v2325 = vadd.f32 %v2132, %v2324
        %v2326 = vpop.f32.mrf.mxu0
        %v2327 = vadd.f32 %v2134, %v2326
        %2328 = vdwg.mxu0
        %v2329 = vtanh.pop %v2171
        %v2330 = vtanh.pop %v2173
        %v2331 = vtanh.pop %v2175
        %v2332 = vtanh.pop %v2177
        %v2333 = vtanh.pop %v2181
        %v2334 = vtanh.pop %v2183
        %v2335 = vtanh.pop %v2185
        %v2336 = vtanh.pop %v2187
        %v2337 = vtanh.pop %v2191
        %v2338 = vtanh.pop %v2193
        %v2339 = vtanh.pop %v2195
        %v2340 = vtanh.pop %v2197
        %v2341 = vtanh.pop %v2201
        %v2342 = vtanh.pop %v2203
        %v2343 = vtanh.pop %v2205
        %v2344 = vtanh.pop %v2207
        %v2345 = vtanh.pop %v2211
        %v2346 = vtanh.pop %v2213
        %v2347 = vtanh.pop %v2215
        %v2348 = vtanh.pop %v2217
        %v2349 = vtanh.pop %v2221
        %v2350 = vtanh.pop %v2223
        %v2351 = vtanh.pop %v2225
        %v2352 = vtanh.pop %v2227
        %v2353 = vtanh.pop %v2231
        %v2354 = vtanh.pop %v2233
        %v2355 = vtanh.pop %v2235
        %v2356 = vtanh.pop %v2237
        %v2357 = vtanh.pop %v2241
        %v2358 = vtanh.pop %v2243
        %v2359 = vtanh.pop %v2245
        %v2360 = vtanh.pop %v2247
        %v2361 = vtanh.pop %v2251
        %v2362 = vtanh.pop %v2253
        %v2363 = vtanh.pop %v2255
        %v2364 = vtanh.pop %v2257
        %v2365 = vtanh.pop %v2261
        %v2366 = vtanh.pop %v2263
        %v2367 = vtanh.pop %v2265
        %v2368 = vtanh.pop %v2267
        %v2369 = vtanh.pop %v2271
        %v2370 = vtanh.pop %v2273
        %v2371 = vtanh.pop %v2275
        %v2372 = vtanh.pop %v2277
        %v2373 = vtanh.pop %v2281
        %v2374 = vtanh.pop %v2283
        %v2375 = vtanh.pop %v2285
        %v2376 = vtanh.pop %v2287
        %v2377 = vtanh.pop %v2291
        %v2378 = vtanh.pop %v2293
        %v2379 = vtanh.pop %v2295
        %v2380 = vtanh.pop %v2297
        %v2381 = vtanh.pop %v2301
        %v2382 = vtanh.pop %v2303
        %v2383 = vtanh.pop %v2305
        %v2384 = vtanh.pop %v2307
        %v2385 = vtanh.pop %v2311
        %v2386 = vtanh.pop %v2313
        %v2387 = vtanh.pop %v2315
        %v2388 = vtanh.pop %v2317
        %v2389 = vtanh.pop %v2321
        %v2390 = vtanh.pop %v2323
        %v2391 = vtanh.pop %v2325
        %v2392 = vtanh.pop %v2327
        %2393 = vst [vmem:[%s287] sm:$0xff] %v2329
        %2394 = vst [vmem:[%s287 + $0x8] sm:$0xff] %v2330
        %2395 = vst [vmem:[%s287 + $0x10] sm:$0xff] %v2331
        %2396 = vst [vmem:[%s287 + $0x18] sm:$0xff] %v2332
        %2397 = vst [vmem:[%s287 + $0x20] sm:$0xff] %v2333
        %2398 = vst [vmem:[%s287 + $0x28] sm:$0xff] %v2334
        %2399 = vst [vmem:[%s287 + $0x30] sm:$0xff] %v2335
        %2400 = vst [vmem:[%s287 + $0x38] sm:$0xff] %v2336
        %2401 = vst [vmem:[%s287 + $0x40] sm:$0xff] %v2337
        %2402 = vst [vmem:[%s287 + $0x48] sm:$0xff] %v2338
        %2403 = vst [vmem:[%s287 + $0x50] sm:$0xff] %v2339
        %2404 = vst [vmem:[%s287 + $0x58] sm:$0xff] %v2340
        %2405 = vst [vmem:[%s287 + $0x60] sm:$0xff] %v2341
        %2406 = vst [vmem:[%s287 + $0x68] sm:$0xff] %v2342
        %2407 = vst [vmem:[%s287 + $0x70] sm:$0xff] %v2343
        %2408 = vst [vmem:[%s287 + $0x78] sm:$0xff] %v2344
        %2409 = vst [vmem:[%s287 + $0x80] sm:$0xff] %v2345
        %2410 = vst [vmem:[%s287 + $0x88] sm:$0xff] %v2346
        %2411 = vst [vmem:[%s287 + $0x90] sm:$0xff] %v2347
        %2412 = vst [vmem:[%s287 + $0x98] sm:$0xff] %v2348
        %2413 = vst [vmem:[%s287 + $0xa0] sm:$0xff] %v2349
        %2414 = vst [vmem:[%s287 + $0xa8] sm:$0xff] %v2350
        %2415 = vst [vmem:[%s287 + $0xb0] sm:$0xff] %v2351
        %2416 = vst [vmem:[%s287 + $0xb8] sm:$0xff] %v2352
        %2417 = vst [vmem:[%s287 + $0xc0] sm:$0xff] %v2353
        %2418 = vst [vmem:[%s287 + $0xc8] sm:$0xff] %v2354
        %2419 = vst [vmem:[%s287 + $0xd0] sm:$0xff] %v2355
        %2420 = vst [vmem:[%s287 + $0xd8] sm:$0xff] %v2356
        %2421 = vst [vmem:[%s287 + $0xe0] sm:$0xff] %v2357
        %2422 = vst [vmem:[%s287 + $0xe8] sm:$0xff] %v2358
        %2423 = vst [vmem:[%s287 + $0xf0] sm:$0xff] %v2359
        %2424 = vst [vmem:[%s287 + $0xf8] sm:$0xff] %v2360
        %2425 = vst [vmem:[%s287 + $0x100] sm:$0xff] %v2361
        %2426 = vst [vmem:[%s287 + $0x108] sm:$0xff] %v2362
        %2427 = vst [vmem:[%s287 + $0x110] sm:$0xff] %v2363
        %2428 = vst [vmem:[%s287 + $0x118] sm:$0xff] %v2364
        %2429 = vst [vmem:[%s287 + $0x120] sm:$0xff] %v2365
        %2430 = vst [vmem:[%s287 + $0x128] sm:$0xff] %v2366
        %2431 = vst [vmem:[%s287 + $0x130] sm:$0xff] %v2367
        %2432 = vst [vmem:[%s287 + $0x138] sm:$0xff] %v2368
        %2433 = vst [vmem:[%s287 + $0x140] sm:$0xff] %v2369
        %2434 = vst [vmem:[%s287 + $0x148] sm:$0xff] %v2370
        %2435 = vst [vmem:[%s287 + $0x150] sm:$0xff] %v2371
        %2436 = vst [vmem:[%s287 + $0x158] sm:$0xff] %v2372
        %2437 = vst [vmem:[%s287 + $0x160] sm:$0xff] %v2373
        %2438 = vst [vmem:[%s287 + $0x168] sm:$0xff] %v2374
        %2439 = vst [vmem:[%s287 + $0x170] sm:$0xff] %v2375
        %2440 = vst [vmem:[%s287 + $0x178] sm:$0xff] %v2376
        %2441 = vst [vmem:[%s287 + $0x180] sm:$0xff] %v2377
        %2442 = vst [vmem:[%s287 + $0x188] sm:$0xff] %v2378
        %2443 = vst [vmem:[%s287 + $0x190] sm:$0xff] %v2379
        %2444 = vst [vmem:[%s287 + $0x198] sm:$0xff] %v2380
        %2445 = vst [vmem:[%s287 + $0x1a0] sm:$0xff] %v2381
        %2446 = vst [vmem:[%s287 + $0x1a8] sm:$0xff] %v2382
        %2447 = vst [vmem:[%s287 + $0x1b0] sm:$0xff] %v2383
        %2448 = vst [vmem:[%s287 + $0x1b8] sm:$0xff] %v2384
        %2449 = vst [vmem:[%s287 + $0x1c0] sm:$0xff] %v2385
        %2450 = vst [vmem:[%s287 + $0x1c8] sm:$0xff] %v2386
        %2451 = vst [vmem:[%s287 + $0x1d0] sm:$0xff] %v2387
        %2452 = vst [vmem:[%s287 + $0x1d8] sm:$0xff] %v2388
        %2453 = vst [vmem:[%s287 + $0x1e0] sm:$0xff] %v2389
        %2454 = vst [vmem:[%s287 + $0x1e8] sm:$0xff] %v2390
        %2455 = vst [vmem:[%s287 + $0x1f0] sm:$0xff] %v2391
        %2456 = vst [vmem:[%s287 + $0x1f8] sm:$0xff] %v2392
        %s2457 = sand.u32 %s182, 1
        %s2458 = scalar_lea.sflag [#allocation4], %s2457
        %s2459 = sand.u32 %s182, 1
        %s2460 = smul.addr %s2459, 512
        %s2461 = scalar_lea.vmem [#allocation5], %s2460
        // Predicated region
        $region53: #{tpu_custom_call.1} parent=47 // pred_check
          %p2462 = pneg %p192
        $region54: #{tpu_custom_call.1} parent=47 // pred_check_branch
          %2464 = sbr.rel (%p2462) target = $region56
        $region55: #{tpu_custom_call.1} parent=47 // pred_region
          %s2465 = smul.u32 32, %s22
          %s2467 = ssub.s32 8192, 8192
          %2468 = vsyncadd %s2458, %s2467
          %s2469 = smul.addr %s2465, 2
          %s2470 = smul.addr %s2469, 128
          %s2471 = scalar_lea.hbm %s7, %s2470
          %s2472 = sshll.u32 %s2461, 4
          %s2473 = int_to_ptr.vmem [resolvable:$true] %s2472
          %2478 = dma.vmem_to_hbm [thread:$0]  %s2473, 8192, %s2471, %s2458, 256, 256, 16
        $region56: #{tpu_custom_call.1} parent=47 // pred_fallthru
          _
      $region48: #{tpu_custom_call.1} parent=5 // pred_fallthru
        _
      %p2479 = scmp.le.s32.totalorder 2, %s17
      // Predicated region
      $region57: #{tpu_custom_call.1} parent=5 // pred_check
        %p2480 = pneg %p2479
      $region58: #{tpu_custom_call.1} parent=5 // pred_check_branch
        %2482 = sbr.rel (%p2480) target = $region60
      $region59: #{tpu_custom_call.1} parent=5 // pred_region
        %s2483 = ssub.s32 %s17, 2
        // Predicated region
        $region61: #{tpu_custom_call.1} parent=59 // pred_check
          %p2484 = pneg %p198
        $region62: #{tpu_custom_call.1} parent=59 // pred_check_branch
          %2486 = sbr.rel (%p2484) target = $region64
        $region63: #{tpu_custom_call.1} parent=59 // pred_region
          %s2487 = sand.u32 %s183, 1
          %s2488 = scalar_lea.sflag [#allocation4], %s2487
          %s2489 = sand.u32 %s183, 1
          %s2490 = smul.addr %s2489, 512
          %s2491 = scalar_lea.vmem [#allocation5], %s2490
          %2492 = dma.done %s2488, 8192
        $region64: #{tpu_custom_call.1} parent=59 // pred_fallthru
          _
      $region60: #{tpu_custom_call.1} parent=5 // pred_fallthru
        _
    $region6: #{tpu_custom_call.1} parent=1 // loop_footer
      %s21 = sadd.s32 1, %s17
    $region7: #{tpu_custom_call.1} parent=1 // loop_footer_branch
      %16 = sbr.rel target = $region3
    $region8: #{tpu_custom_call.1} parent=1 // loop_exit
      _
    %2493 = vsyncpa [#allocation3], 1
    %s2494 = scalar_lea.sflag [#allocation3], 1
    %2495 = vsyncpa %s2494, 1
    %2496 = vsyncpa [#allocation4], 1
    %s2497 = scalar_lea.sflag [#allocation4], 1
    %2498 = vsyncpa %s2497, 1

</llo_original>
